<compile_context>
chip_gen: v7x
topology: tpu7x:2x2x1
jax: 0.10.0
libtpu: 0.0.40
codegen_flags: <defaults>
</compile_context>

<pallas_src>
import functools

import jax
import jax.numpy as jnp
from jax.experimental import pallas as pl
from jax.experimental.pallas import tpu as pltpu


# ---------------------------------------------------------------------------
# Kernels
# ---------------------------------------------------------------------------
def _attn_fwd_kernel(x_ref, wq_ref, wk_ref, wv_ref, wp_ref, b_ref, o_ref, *,
                     num_heads, head_dim):
    """Full attention forward (attention_block=False) for one batch element.

    x_ref: (N, C).  w*_ref: (C, C) pre-transposed to (in, out); the softmax
    scale is already folded into wq.  b_ref: (1, C) float32.
    """
    H, D = num_heads, head_dim
    x = x_ref[...]                                        # (N, C), compute dtype
    N = x.shape[0]

    # Full-width projections: contraction over the whole channel dim C feeds
    # the MXU at full width (instead of H tiny D-wide matmuls).
    q = jnp.dot(x, wq_ref[...], preferred_element_type=jnp.float32)   # (N, C), scaled
    k = jnp.dot(x, wk_ref[...], preferred_element_type=jnp.float32)
    v = jnp.dot(x, wv_ref[...], preferred_element_type=jnp.float32)

    # (N, C) -> (H, N, D): one relayout per tensor instead of H lane-narrow slices.
    qh = q.reshape(N, H, D).transpose(1, 0, 2).astype(x.dtype)
    kh = k.reshape(N, H, D).transpose(1, 0, 2).astype(x.dtype)
    vh = v.reshape(N, H, D).transpose(1, 0, 2).astype(x.dtype)

    # Head-batched scores; contraction on the last dims, no explicit k.T.
    s = jnp.einsum('hnd,hmd->hnm', qh, kh,
                   preferred_element_type=jnp.float32)                # (H, N, N) f32

    # Softmax in f32 on the VPU; the reciprocal goes to the otherwise-idle EUP.
    s = s - jnp.max(s, axis=-1, keepdims=True)
    p = jnp.exp(s)
    p = p * pl.reciprocal(jnp.sum(p, axis=-1, keepdims=True), approx=True)

    # attn @ v, batched over heads.
    ctx = jnp.einsum('hnm,hmd->hnd', p.astype(x.dtype), vh,
                     preferred_element_type=jnp.float32)              # (H, N, D)

    # Merge heads ((attn@v).transpose(1,2).reshape(B,N,C)) and apply the output
    # projection with one full-width matmul (no concat of lane-narrow arrays).
    ctx = ctx.transpose(1, 0, 2).reshape(N, H * D).astype(x.dtype)    # (N, C)
    out = jnp.dot(ctx, wp_ref[...], preferred_element_type=jnp.float32) + b_ref[...]
    o_ref[...] = out.astype(o_ref.dtype)


def _attn_probs_kernel(x_ref, wq_ref, wk_ref, o_ref, *, num_heads, head_dim):
    """attention_block=True: softmax(q k^T * scale) -> (H, N, N).

    v / output projection are not needed for this path and are skipped.
    """
    H, D = num_heads, head_dim
    x = x_ref[...]                                        # (N, C)
    N = x.shape[0]

    q = jnp.dot(x, wq_ref[...], preferred_element_type=jnp.float32)   # scale folded in
    k = jnp.dot(x, wk_ref[...], preferred_element_type=jnp.float32)

    qh = q.reshape(N, H, D).transpose(1, 0, 2).astype(x.dtype)
    kh = k.reshape(N, H, D).transpose(1, 0, 2).astype(x.dtype)

    s = jnp.einsum('hnd,hmd->hnm', qh, kh, preferred_element_type=jnp.float32)
    s = s - jnp.max(s, axis=-1, keepdims=True)
    p = jnp.exp(s)
    p = p * pl.reciprocal(jnp.sum(p, axis=-1, keepdims=True), approx=True)
    o_ref[...] = p.astype(o_ref.dtype)


# ---------------------------------------------------------------------------
# Parameter preparation (do once at load time, not per forward call)
# ---------------------------------------------------------------------------
def prepare_attention_params(w_qkv, w_proj, b_proj, *, num_heads,
                             compute_dtype=jnp.float32):
    """w_qkv: (3C, C) torch layout.  w_proj: (C, C).  b_proj: (C,)."""
    three_c, C = w_qkv.shape
    assert three_c == 3 * C and C % num_heads == 0
    D = C // num_heads
    scale = D ** (-0.5)
    w_qkv = jnp.asarray(w_qkv, jnp.float32)
    return {
        # (in, out) layout so the kernel does plain x @ W; scale folded into Wq.
        'wq': (w_qkv[0:C, :].T * scale).astype(compute_dtype),
        'wk': w_qkv[C:2 * C, :].T.astype(compute_dtype),
        'wv': w_qkv[2 * C:3 * C, :].T.astype(compute_dtype),
        'wp': jnp.asarray(w_proj, jnp.float32).T.astype(compute_dtype),
        'b': jnp.asarray(b_proj, jnp.float32).reshape(1, C),   # bias added in f32
    }


# ---------------------------------------------------------------------------
# Wrapper
# ---------------------------------------------------------------------------
def attention_forward(x, params, *, num_heads, attention_block=False):
    """x: (B, N, C).  params: output of prepare_attention_params()."""
    B, N, C = x.shape
    assert C % num_heads == 0
    D = C // num_heads
    out_dtype = x.dtype
    x = x.astype(params['wq'].dtype)

    # Constant index_map -> the weight tiles stay resident across the B grid.
    weight_spec = pl.BlockSpec((C, C), lambda b: (0, 0))

    if not attention_block:
        kernel = functools.partial(_attn_fwd_kernel, num_heads=num_heads, head_dim=D)
        return pl.pallas_call(
            kernel,
            out_shape=jax.ShapeDtypeStruct((B, N, C), out_dtype),
            grid_spec=pltpu.PrefetchScalarGridSpec(
                num_scalar_prefetch=0,
                grid=(B,),
                in_specs=[
                    pl.BlockSpec((None, N, C), lambda b: (b, 0, 0)),   # x (batch squeezed)
                    weight_spec, weight_spec, weight_spec,             # wq, wk, wv
                    weight_spec,                                       # wp
                    pl.BlockSpec((1, C), lambda b: (0, 0)),            # bias
                ],
                out_specs=pl.BlockSpec((None, N, C), lambda b: (b, 0, 0)),
            ),
            compiler_params=pltpu.CompilerParams(
                dimension_semantics=("parallel",)),
        )(x, params['wq'], params['wk'], params['wv'], params['wp'], params['b'])
    else:
        kernel = functools.partial(_attn_probs_kernel, num_heads=num_heads, head_dim=D)
        return pl.pallas_call(
            kernel,
            out_shape=jax.ShapeDtypeStruct((B, num_heads, N, N), jnp.float32),
            grid_spec=pltpu.PrefetchScalarGridSpec(
                num_scalar_prefetch=0,
                grid=(B,),
                in_specs=[
                    pl.BlockSpec((None, N, C), lambda b: (b, 0, 0)),
                    weight_spec, weight_spec,                          # wq, wk
                ],
                out_specs=pl.BlockSpec((None, num_heads, N, N),
                                       lambda b: (b, 0, 0, 0)),
            ),
            compiler_params=pltpu.CompilerParams(
                dimension_semantics=("parallel",)),
        )(x, params['wq'], params['wk'])


# ---------------------------------------------------------------------------
# Pure-JAX references (mirror the PyTorch forward exactly)
# ---------------------------------------------------------------------------
def attention_reference(x, w_qkv, w_proj, b_proj, *, num_heads):
    B, N, C = x.shape
    D = C // num_heads
    scale = D ** (-0.5)
    qkv = x @ w_qkv.T                                        # qkv_bias=False
    qkv = qkv.reshape(B, N, 3, num_heads, D).transpose(2, 0, 3, 1, 4)
    q, k, v = qkv[0], qkv[1], qkv[2]                         # (B, H, N, D)
    attn = jnp.einsum("bhnd,bhmd->bhnm", q, k) * scale
    attn = jax.nn.softmax(attn, axis=-1)
    out = jnp.einsum("bhnm,bhmd->bhnd", attn, v)
    out = out.transpose(0, 2, 1, 3).reshape(B, N, C)
    return out @ w_proj.T + b_proj


def attention_probs_reference(x, w_qkv, *, num_heads):
    B, N, C = x.shape
    D = C // num_heads
    scale = D ** (-0.5)
    qkv = x @ w_qkv.T
    qkv = qkv.reshape(B, N, 3, num_heads, D).transpose(2, 0, 3, 1, 4)
    q, k = qkv[0], qkv[1]
    attn = jnp.einsum("bhnd,bhmd->bhnm", q, k) * scale
    return jax.nn.softmax(attn, axis=-1)


# ---------------------------------------------------------------------------
if __name__ == "__main__":
    B, N, C = 2, 16, 64
    num_heads = 4

    key = jax.random.PRNGKey(0)
    kx, kqkv, kproj, kb = jax.random.split(key, 4)

    bound = 1.0 / (C ** 0.5)
    x = jax.random.normal(kx, (B, N, C), dtype=jnp.float32)
    w_qkv = jax.random.uniform(kqkv, (3 * C, C), jnp.float32, -bound, bound)
    w_proj = jax.random.uniform(kproj, (C, C), jnp.float32, -bound, bound)
    b_proj = jax.random.uniform(kb, (C,), jnp.float32, -bound, bound)

    ref = attention_reference(x, w_qkv, w_proj, b_proj, num_heads=num_heads)
    probs_ref = attention_probs_reference(x, w_qkv, num_heads=num_heads)

    # ---- float32 compute path -------------------------------------------------
    params = prepare_attention_params(w_qkv, w_proj, b_proj, num_heads=num_heads)
    out = jax.block_until_ready(
        attention_forward(x, params, num_heads=num_heads, attention_block=False))
    assert out.shape == (B, N, C)
    assert jnp.allclose(out, ref, atol=5e-3, rtol=5e-3), (
        f"fwd max abs err {jnp.max(jnp.abs(out - ref))}")

    # ---- attention_block=True path (softmax probabilities) --------------------
    probs = jax.block_until_ready(
        attention_forward(x, params, num_heads=num_heads, attention_block=True))
    assert probs.shape == (B, num_heads, N, N)
    assert jnp.allclose(jnp.sum(probs, axis=-1), 1.0, atol=5e-3)
    assert jnp.allclose(probs, probs_ref, atol=5e-3, rtol=5e-3), (
        f"probs max abs err {jnp.max(jnp.abs(probs - probs_ref))}")

    # ---- bfloat16 compute path (MXU-friendly dtype; looser tolerance) ---------
    params_bf16 = prepare_attention_params(
        w_qkv, w_proj, b_proj, num_heads=num_heads, compute_dtype=jnp.bfloat16)
    out_bf16 = jax.block_until_ready(
        attention_forward(x, params_bf16, num_heads=num_heads, attention_block=False))
    assert out_bf16.shape == (B, N, C)
    assert jnp.allclose(out_bf16.astype(jnp.float32), ref, atol=1e-1, rtol=1e-1), (
        f"bf16 fwd max abs err {jnp.max(jnp.abs(out_bf16.astype(jnp.float32) - ref))}")

    print("KERNEL_OK")
</pallas_src>

<mosaic_0001>
module attributes {stable_mosaic.version = 11 : i64} {
  func.func @_attn_fwd_kernel(%arg0: i32, %arg1: memref<1x16x64xf32, #tpu.memory_space<vmem>>, %arg2: memref<64x64xf32, #tpu.memory_space<vmem>>, %arg3: memref<64x64xf32, #tpu.memory_space<vmem>>, %arg4: memref<64x64xf32, #tpu.memory_space<vmem>>, %arg5: memref<64x64xf32, #tpu.memory_space<vmem>>, %arg6: memref<1x64xf32, #tpu.memory_space<vmem>>, %arg7: memref<1x16x64xf32, #tpu.memory_space<vmem>>) attributes {dimension_semantics = [#tpu.dimension_semantics<parallel>], iteration_bounds = array<i64: 2>, scalar_prefetch = 0 : i64, scratch_operands = 0 : i64, tpu.core_type = #tpu.core_type<tc>, window_params = [{transform_indices = @transform_0, window_bounds = array<i64: 1, 16, 64>}, {pipeline_mode = #tpu.pipeline_mode<synchronous>, transform_indices = @transform_1, window_bounds = array<i64: 64, 64>}, {pipeline_mode = #tpu.pipeline_mode<synchronous>, transform_indices = @transform_2, window_bounds = array<i64: 64, 64>}, {pipeline_mode = #tpu.pipeline_mode<synchronous>, transform_indices = @transform_3, window_bounds = array<i64: 64, 64>}, {pipeline_mode = #tpu.pipeline_mode<synchronous>, transform_indices = @transform_4, window_bounds = array<i64: 64, 64>}, {pipeline_mode = #tpu.pipeline_mode<synchronous>, transform_indices = @transform_5, window_bounds = array<i64: 1, 64>}, {transform_indices = @transform_6, window_bounds = array<i64: 1, 16, 64>}]} {
    %c0 = arith.constant 0 : index
    %c0_0 = arith.constant 0 : index
    %c0_1 = arith.constant 0 : index
    %0 = vector.load %arg1[%c0, %c0_0, %c0_1] : memref<1x16x64xf32, #tpu.memory_space<vmem>>, vector<1x16x64xf32>
    %1 = vector.shape_cast %0 : vector<1x16x64xf32> to vector<16x64xf32>
    %c0_2 = arith.constant 0 : index
    %c0_3 = arith.constant 0 : index
    %2 = vector.load %arg2[%c0_2, %c0_3] : memref<64x64xf32, #tpu.memory_space<vmem>>, vector<64x64xf32>
    %cst = arith.constant dense<0.000000e+00> : vector<16x64xf32>
    %3 = tpu.matmul %1, %2, %cst {dimension_numbers = #tpu.dot_dimension_numbers<[1], [0], [0], [1], [0, 0, 1, 1], [], []>} : vector<16x64xf32>, vector<64x64xf32>, vector<16x64xf32> -> vector<16x64xf32>
    %c0_4 = arith.constant 0 : index
    %c0_5 = arith.constant 0 : index
    %4 = vector.load %arg3[%c0_4, %c0_5] : memref<64x64xf32, #tpu.memory_space<vmem>>, vector<64x64xf32>
    %cst_6 = arith.constant dense<0.000000e+00> : vector<16x64xf32>
    %5 = tpu.matmul %1, %4, %cst_6 {dimension_numbers = #tpu.dot_dimension_numbers<[1], [0], [0], [1], [0, 0, 1, 1], [], []>} : vector<16x64xf32>, vector<64x64xf32>, vector<16x64xf32> -> vector<16x64xf32>
    %c0_7 = arith.constant 0 : index
    %c0_8 = arith.constant 0 : index
    %6 = vector.load %arg4[%c0_7, %c0_8] : memref<64x64xf32, #tpu.memory_space<vmem>>, vector<64x64xf32>
    %cst_9 = arith.constant dense<0.000000e+00> : vector<16x64xf32>
    %7 = tpu.matmul %1, %6, %cst_9 {dimension_numbers = #tpu.dot_dimension_numbers<[1], [0], [0], [1], [0, 0, 1, 1], [], []>} : vector<16x64xf32>, vector<64x64xf32>, vector<16x64xf32> -> vector<16x64xf32>
    %8 = vector.shape_cast %3 : vector<16x64xf32> to vector<16x4x16xf32>
    %9 = tpu.transpose %8, [1, 0, 2] : vector<16x4x16xf32> -> vector<4x16x16xf32>
    %10 = vector.shape_cast %5 : vector<16x64xf32> to vector<16x4x16xf32>
    %11 = tpu.transpose %10, [1, 0, 2] : vector<16x4x16xf32> -> vector<4x16x16xf32>
    %12 = vector.shape_cast %7 : vector<16x64xf32> to vector<16x4x16xf32>
    %13 = tpu.transpose %12, [1, 0, 2] : vector<16x4x16xf32> -> vector<4x16x16xf32>
    "tpu.trace_start"() <{level = 10 : i32, message = "hnd,hmd->hnm"}> : () -> ()
    %cst_10 = arith.constant dense<0.000000e+00> : vector<4x16x16xf32>
    %14 = tpu.matmul %9, %11, %cst_10 {dimension_numbers = #tpu.dot_dimension_numbers<[2], [2], [1], [1], [0, 0, 0, 1, 1, 1], [0], [0]>} : vector<4x16x16xf32>, vector<4x16x16xf32>, vector<4x16x16xf32> -> vector<4x16x16xf32>
    "tpu.trace_stop"() : () -> ()
    %cst_11 = arith.constant dense<0xFF800000> : vector<4x16xf32>
    %15 = vector.multi_reduction <maximumf>, %14, %cst_11 [2] : vector<4x16x16xf32> to vector<4x16xf32>
    %16 = vector.shape_cast %15 : vector<4x16xf32> to vector<4x16x1xf32>
    %17 = vector.broadcast %16 : vector<4x16x1xf32> to vector<4x16x16xf32>
    %18 = arith.subf %14, %17 : vector<4x16x16xf32>
    %19 = math.exp %18 : vector<4x16x16xf32>
    %cst_12 = arith.constant dense<0.000000e+00> : vector<4x16xf32>
    %20 = vector.multi_reduction <add>, %19, %cst_12 [2] : vector<4x16x16xf32> to vector<4x16xf32>
    %21 = vector.shape_cast %20 : vector<4x16xf32> to vector<4x16x1xf32>
    %22 = tpu.reciprocal %21 {approx = true} : vector<4x16x1xf32> -> vector<4x16x1xf32>
    %23 = vector.broadcast %22 : vector<4x16x1xf32> to vector<4x16x16xf32>
    %24 = arith.mulf %19, %23 : vector<4x16x16xf32>
    "tpu.trace_start"() <{level = 10 : i32, message = "hnm,hmd->hnd"}> : () -> ()
    %cst_13 = arith.constant dense<0.000000e+00> : vector<4x16x16xf32>
    %25 = tpu.matmul %24, %13, %cst_13 {dimension_numbers = #tpu.dot_dimension_numbers<[2], [1], [1], [2], [0, 0, 0, 1, 1, 2], [0], [0]>} : vector<4x16x16xf32>, vector<4x16x16xf32>, vector<4x16x16xf32> -> vector<4x16x16xf32>
    "tpu.trace_stop"() : () -> ()
    %26 = tpu.transpose %25, [1, 0, 2] : vector<4x16x16xf32> -> vector<16x4x16xf32>
    %27 = vector.shape_cast %26 : vector<16x4x16xf32> to vector<16x64xf32>
    %c0_14 = arith.constant 0 : index
    %c0_15 = arith.constant 0 : index
    %28 = vector.load %arg5[%c0_14, %c0_15] : memref<64x64xf32, #tpu.memory_space<vmem>>, vector<64x64xf32>
    %cst_16 = arith.constant dense<0.000000e+00> : vector<16x64xf32>
    %29 = tpu.matmul %27, %28, %cst_16 {dimension_numbers = #tpu.dot_dimension_numbers<[1], [0], [0], [1], [0, 0, 1, 1], [], []>} : vector<16x64xf32>, vector<64x64xf32>, vector<16x64xf32> -> vector<16x64xf32>
    %c0_17 = arith.constant 0 : index
    %c0_18 = arith.constant 0 : index
    %30 = vector.load %arg6[%c0_17, %c0_18] : memref<1x64xf32, #tpu.memory_space<vmem>>, vector<1x64xf32>
    %31 = vector.broadcast %30 : vector<1x64xf32> to vector<16x64xf32>
    %32 = arith.addf %29, %31 : vector<16x64xf32>
    %c0_19 = arith.constant 0 : index
    %c0_20 = arith.constant 0 : index
    %c0_21 = arith.constant 0 : index
    %33 = vector.load %arg7[%c0_19, %c0_20, %c0_21] : memref<1x16x64xf32, #tpu.memory_space<vmem>>, vector<1x16x64xf32>
    %34 = vector.shape_cast %33 : vector<1x16x64xf32> to vector<16x64xf32>
    %35 = vector.shape_cast %32 : vector<16x64xf32> to vector<1x16x64xf32>
    tpu.vector_store %arg7[%c0_19, %c0_20, %c0_21], %35 {strides = array<i32>} : memref<1x16x64xf32, #tpu.memory_space<vmem>>, vector<1x16x64xf32>,
    return
  }
  func.func @transform_0(%arg0: i32) -> (i32, i32, i32) {
    %c0_i32 = arith.constant 0 : i32
    %c0_i32_0 = arith.constant 0 : i32
    %c0_i32_1 = arith.constant 0 : i32
    return %arg0, %c0_i32, %c0_i32_0 : i32, i32, i32
  }
  func.func @transform_1(%arg0: i32) -> (i32, i32) {
    %c0_i32 = arith.constant 0 : i32
    %c0_i32_0 = arith.constant 0 : i32
    %c0_i32_1 = arith.constant 0 : i32
    return %c0_i32, %c0_i32_0 : i32, i32
  }
  func.func @transform_2(%arg0: i32) -> (i32, i32) {
    %c0_i32 = arith.constant 0 : i32
    %c0_i32_0 = arith.constant 0 : i32
    %c0_i32_1 = arith.constant 0 : i32
    return %c0_i32, %c0_i32_0 : i32, i32
  }
  func.func @transform_3(%arg0: i32) -> (i32, i32) {
    %c0_i32 = arith.constant 0 : i32
    %c0_i32_0 = arith.constant 0 : i32
    %c0_i32_1 = arith.constant 0 : i32
    return %c0_i32, %c0_i32_0 : i32, i32
  }
  func.func @transform_4(%arg0: i32) -> (i32, i32) {
    %c0_i32 = arith.constant 0 : i32
    %c0_i32_0 = arith.constant 0 : i32
    %c0_i32_1 = arith.constant 0 : i32
    return %c0_i32, %c0_i32_0 : i32, i32
  }
  func.func @transform_5(%arg0: i32) -> (i32, i32) {
    %c0_i32 = arith.constant 0 : i32
    %c0_i32_0 = arith.constant 0 : i32
    %c0_i32_1 = arith.constant 0 : i32
    return %c0_i32, %c0_i32_0 : i32, i32
  }
  func.func @transform_6(%arg0: i32) -> (i32, i32, i32) {
    %c0_i32 = arith.constant 0 : i32
    %c0_i32_0 = arith.constant 0 : i32
    %c0_i32_1 = arith.constant 0 : i32
    return %arg0, %c0_i32, %c0_i32_0 : i32, i32, i32
  }
}

</mosaic_0001>

<llo_original>
// kernel: tpu_custom_call.1
$region0: #{tpu_custom_call.1}
  #allocation0 [shape = 'u32[]', space=smem, size = 0x4, offset = 0x4, fixed_abs, tag = 'smem constant byte address 0x4 - core index']
  #allocation1 [shape = 'u32[144,128]{1,0:T(1,128)}', space=vmem, size = 0x12000, scoped, tag = 'internal scratch']
  %s0 = inlined_call_operand.hbm [shape: f32[2,16,64], index: 0, kind: input, shape index: {}]
  %s1 = inlined_call_operand.hbm [shape: f32[64,64], index: 1, kind: input, shape index: {}]
  %s2 = inlined_call_operand.hbm [shape: f32[64,64], index: 2, kind: input, shape index: {}]
  %s3 = inlined_call_operand.hbm [shape: f32[64,64], index: 3, kind: input, shape index: {}]
  %s4 = inlined_call_operand.hbm [shape: f32[64,64], index: 4, kind: input, shape index: {}]
  %s5 = inlined_call_operand.vmem [shape: f32[1,64], index: 5, kind: input, shape index: {}]
  %s6 = inlined_call_operand.hbm [shape: f32[2,16,64], index: 6, kind: output, shape index: {}]
  %s7 = sld [smem:[#allocation0]]
  $region77: #{tpu_custom_call.1} parent=0
    _
  %s9 = ssub.s32 1, %s7
  %s10 = scalar_select 0, %s9, %s7
  $region1: #{tpu_custom_call.1} parent=0
    #allocation2 [shape = 'u8[16384]{0}', space=vmem, size = 0x4000, scoped, tag = 'input window, operand 0']
    #allocation3 [shape = 's32[2]{0}', space=sflag, size = 0x8, scoped, tag = 'scoped memory for tpu_custom_call.1']
    #allocation4 [shape = 's32[2]{0}', space=sflag, size = 0x8, scoped, tag = 'scoped memory for tpu_custom_call.1']
    #allocation5 [shape = 'u8[32768]{0}', space=vmem, size = 0x8000, scoped, tag = 'input window, operand 1, single buffered']
    #allocation6 [shape = 's32[1]{0}', space=sflag, size = 0x4, scoped, tag = 'scoped memory for tpu_custom_call.1']
    #allocation7 [shape = 'u8[32768]{0}', space=vmem, size = 0x8000, scoped, tag = 'input window, operand 2, single buffered']
    #allocation8 [shape = 'u8[32768]{0}', space=vmem, size = 0x8000, scoped, tag = 'input window, operand 3, single buffered']
    #allocation9 [shape = 's32[1]{0}', space=sflag, size = 0x4, scoped, tag = 'scoped memory for tpu_custom_call.1']
    #allocation10 [shape = 'u8[32768]{0}', space=vmem, size = 0x8000, scoped, tag = 'input window, operand 4, single buffered']
    #allocation11 [shape = 'u8[16384]{0}', space=vmem, size = 0x4000, scoped, tag = 'output window, operand 0']
    %11 = vsyncpa [#allocation3], 0
    %s12 = scalar_lea.sflag [#allocation3], 1
    %13 = vsyncpa %s12, 0
    %14 = vsyncpa [#allocation6], 0
    %15 = vsyncpa [#allocation9], 0
    %16 = vsyncpa [#allocation4], 0
    %s17 = scalar_lea.sflag [#allocation4], 1
    %18 = vsyncpa %s17, 0
    loop: start=0, step=1, limit=4
    $region2: #{tpu_custom_call.1} parent=1 // loop_pre_header
      _
    $region3: #{tpu_custom_call.1} parent=1 // loop_header
      %s20 = sphi 0, %s24
      %p21 = scmp.ge.s32.totalorder %s20, 4
      %s30 = sphi 0, %s32
      %s33 = sphi 0, %s30
      %s34 = sphi 0, %s33
      %s50 = sphi 0, %s34
      %s54 = sphi 0, %s54
      %s56 = sphi 0, %s54
      %s57 = sphi 0, %s56
      %s71 = sphi 0, %s57
      %s75 = sphi 0, %s75
      %s77 = sphi 0, %s75
      %s78 = sphi 0, %s77
      %s92 = sphi 0, %s78
      %s96 = sphi 0, %s96
      %s98 = sphi 0, %s96
      %s99 = sphi 0, %s98
      %s113 = sphi 0, %s99
      %s117 = sphi 0, %s117
      %s119 = sphi 0, %s117
      %s120 = sphi 0, %s119
      %s134 = sphi 0, %s120
      %s138 = sphi 0, %s138
      %s140 = sphi 0, %s138
      %s141 = sphi 0, %s140
      %s155 = sphi 0, %s141
      %s161 = sphi 0, %s163
      %s164 = sphi 0, %s161
      %s165 = sphi 0, %s164
      %s181 = sphi 0, %s165
    $region4: #{tpu_custom_call.1} parent=1 // loop_header_branch
      %23 = sbr.rel (%p21) target = $region8
    $region5: #{tpu_custom_call.1} parent=1 // loop_body
      %s25 = ssub.s32 %s20, 1
      %s26 = ssub.s32 %s20, 2
      %s27 = sadd.s32 %s20, 1
      %s28 = ssub.s32 %s20, %s27
      %p29 = scmp.eq.s32.totalorder %s28, 0
      %s31 = sadd.s32 %s30, 1
      %s32 = scalar_select %p29, %s30, %s31
      %p35 = pneg %p29
      %p36 = scmp.eq.s32.totalorder %s20, 1
      %p37 = por %p35, %p36
      %p38 = scmp.ne.s32.totalorder %s30, %s33
      %p39 = scmp.eq.s32.totalorder %s20, 0
      %p40 = por %p38, %p39
      %p41 = scmp.ne.s32.totalorder %s30, %s33
      %p42 = scmp.eq.s32.totalorder %s25, 1
      %p43 = por %p41, %p42
      %p44 = scmp.ne.s32.totalorder %s33, %s34
      %p45 = scmp.eq.s32.totalorder %s25, 0
      %p46 = por %p44, %p45
      %p47 = scmp.ne.s32.totalorder %s33, %s34
      %p48 = scmp.eq.s32.totalorder %s26, 1
      %p49 = por %p47, %p48
      %p51 = scmp.ne.s32.totalorder %s34, %s50
      %p52 = scmp.eq.s32.totalorder %s26, 0
      %p53 = por %p51, %p52
      %s55 = sadd.s32 %s54, 1
      %p58 = scmp.eq.s32.totalorder %s20, 1
      %p59 = scmp.ne.s32.totalorder %s54, %s56
      %p60 = scmp.eq.s32.totalorder %s20, 0
      %p61 = por %p59, %p60
      %p62 = scmp.ne.s32.totalorder %s54, %s56
      %p63 = scmp.eq.s32.totalorder %s25, 1
      %p64 = por %p62, %p63
      %p65 = scmp.ne.s32.totalorder %s56, %s57
      %p66 = scmp.eq.s32.totalorder %s25, 0
      %p67 = por %p65, %p66
      %p68 = scmp.ne.s32.totalorder %s56, %s57
      %p69 = scmp.eq.s32.totalorder %s26, 1
      %p70 = por %p68, %p69
      %p72 = scmp.ne.s32.totalorder %s57, %s71
      %p73 = scmp.eq.s32.totalorder %s26, 0
      %p74 = por %p72, %p73
      %s76 = sadd.s32 %s75, 1
      %p79 = scmp.eq.s32.totalorder %s20, 1
      %p80 = scmp.ne.s32.totalorder %s75, %s77
      %p81 = scmp.eq.s32.totalorder %s20, 0
      %p82 = por %p80, %p81
      %p83 = scmp.ne.s32.totalorder %s75, %s77
      %p84 = scmp.eq.s32.totalorder %s25, 1
      %p85 = por %p83, %p84
      %p86 = scmp.ne.s32.totalorder %s77, %s78
      %p87 = scmp.eq.s32.totalorder %s25, 0
      %p88 = por %p86, %p87
      %p89 = scmp.ne.s32.totalorder %s77, %s78
      %p90 = scmp.eq.s32.totalorder %s26, 1
      %p91 = por %p89, %p90
      %p93 = scmp.ne.s32.totalorder %s78, %s92
      %p94 = scmp.eq.s32.totalorder %s26, 0
      %p95 = por %p93, %p94
      %s97 = sadd.s32 %s96, 1
      %p100 = scmp.eq.s32.totalorder %s20, 1
      %p101 = scmp.ne.s32.totalorder %s96, %s98
      %p102 = scmp.eq.s32.totalorder %s20, 0
      %p103 = por %p101, %p102
      %p104 = scmp.ne.s32.totalorder %s96, %s98
      %p105 = scmp.eq.s32.totalorder %s25, 1
      %p106 = por %p104, %p105
      %p107 = scmp.ne.s32.totalorder %s98, %s99
      %p108 = scmp.eq.s32.totalorder %s25, 0
      %p109 = por %p107, %p108
      %p110 = scmp.ne.s32.totalorder %s98, %s99
      %p111 = scmp.eq.s32.totalorder %s26, 1
      %p112 = por %p110, %p111
      %p114 = scmp.ne.s32.totalorder %s99, %s113
      %p115 = scmp.eq.s32.totalorder %s26, 0
      %p116 = por %p114, %p115
      %s118 = sadd.s32 %s117, 1
      %p121 = scmp.eq.s32.totalorder %s20, 1
      %p122 = scmp.ne.s32.totalorder %s117, %s119
      %p123 = scmp.eq.s32.totalorder %s20, 0
      %p124 = por %p122, %p123
      %p125 = scmp.ne.s32.totalorder %s117, %s119
      %p126 = scmp.eq.s32.totalorder %s25, 1
      %p127 = por %p125, %p126
      %p128 = scmp.ne.s32.totalorder %s119, %s120
      %p129 = scmp.eq.s32.totalorder %s25, 0
      %p130 = por %p128, %p129
      %p131 = scmp.ne.s32.totalorder %s119, %s120
      %p132 = scmp.eq.s32.totalorder %s26, 1
      %p133 = por %p131, %p132
      %p135 = scmp.ne.s32.totalorder %s120, %s134
      %p136 = scmp.eq.s32.totalorder %s26, 0
      %p137 = por %p135, %p136
      %s139 = sadd.s32 %s138, 1
      %p142 = scmp.eq.s32.totalorder %s20, 1
      %p143 = scmp.ne.s32.totalorder %s138, %s140
      %p144 = scmp.eq.s32.totalorder %s20, 0
      %p145 = por %p143, %p144
      %p146 = scmp.ne.s32.totalorder %s138, %s140
      %p147 = scmp.eq.s32.totalorder %s25, 1
      %p148 = por %p146, %p147
      %p149 = scmp.ne.s32.totalorder %s140, %s141
      %p150 = scmp.eq.s32.totalorder %s25, 0
      %p151 = por %p149, %p150
      %p152 = scmp.ne.s32.totalorder %s140, %s141
      %p153 = scmp.eq.s32.totalorder %s26, 1
      %p154 = por %p152, %p153
      %p156 = scmp.ne.s32.totalorder %s141, %s155
      %p157 = scmp.eq.s32.totalorder %s26, 0
      %p158 = por %p156, %p157
      %s159 = ssub.s32 %s20, %s27
      %p160 = scmp.eq.s32.totalorder %s159, 0
      %s162 = sadd.s32 %s161, 1
      %s163 = scalar_select %p160, %s161, %s162
      %p166 = pneg %p160
      %p167 = scmp.eq.s32.totalorder %s20, 1
      %p168 = por %p166, %p167
      %p169 = scmp.ne.s32.totalorder %s161, %s164
      %p170 = scmp.eq.s32.totalorder %s20, 0
      %p171 = por %p169, %p170
      %p172 = scmp.ne.s32.totalorder %s161, %s164
      %p173 = scmp.eq.s32.totalorder %s25, 1
      %p174 = por %p172, %p173
      %p175 = scmp.ne.s32.totalorder %s164, %s165
      %p176 = scmp.eq.s32.totalorder %s25, 0
      %p177 = por %p175, %p176
      %p178 = scmp.ne.s32.totalorder %s164, %s165
      %p179 = scmp.eq.s32.totalorder %s26, 1
      %p180 = por %p178, %p179
      %p182 = scmp.ne.s32.totalorder %s165, %s181
      %p183 = scmp.eq.s32.totalorder %s26, 0
      %p184 = por %p182, %p183
      %p185 = scmp.le.s32.totalorder 1, %s20
      %p186 = scmp.lt.s32.totalorder %s20, 3
      %p187 = pnand %p185, %p186
      %p188 = pneg %p187
      // Predicated region
      $region9: #{tpu_custom_call.1} parent=5 // pred_check
        _
      $region10: #{tpu_custom_call.1} parent=5 // pred_check_branch
        %190 = sbr.rel (%p187) target = $region12
      $region11: #{tpu_custom_call.1} parent=5 // pred_region
        %s191 = ssub.s32 %s20, 1
        // Predicated region
        $region13: #{tpu_custom_call.1} parent=11 // pred_check
          %p192 = pneg %p67
        $region14: #{tpu_custom_call.1} parent=11 // pred_check_branch
          %194 = sbr.rel (%p192) target = $region16
        $region15: #{tpu_custom_call.1} parent=11 // pred_region
          %s196 = ssub.s32 1024, 1024
          %197 = vsyncadd [#allocation6], %s196
          %s198 = sshll.u32 [#allocation5], 4
          %s199 = int_to_ptr.vmem [resolvable:$true] %s198
          %204 = dma.hbm_to_vmem [thread:$0]  %s1, 1024, %s199, [#allocation6], 128, 128, 8
        $region16: #{tpu_custom_call.1} parent=11 // pred_fallthru
          _
        // Predicated region
        $region17: #{tpu_custom_call.1} parent=11 // pred_check
          %p205 = pneg %p88
        $region18: #{tpu_custom_call.1} parent=11 // pred_check_branch
          %207 = sbr.rel (%p205) target = $region20
        $region19: #{tpu_custom_call.1} parent=11 // pred_region
          %s209 = ssub.s32 1024, 1024
          %210 = vsyncadd [#allocation6], %s209
          %s211 = sshll.u32 [#allocation7], 4
          %s212 = int_to_ptr.vmem [resolvable:$true] %s211
          %217 = dma.hbm_to_vmem [thread:$0]  %s2, 1024, %s212, [#allocation6], 128, 128, 8
        $region20: #{tpu_custom_call.1} parent=11 // pred_fallthru
          _
        // Predicated region
        $region21: #{tpu_custom_call.1} parent=11 // pred_check
          %p218 = pneg %p109
        $region22: #{tpu_custom_call.1} parent=11 // pred_check_branch
          %220 = sbr.rel (%p218) target = $region24
        $region23: #{tpu_custom_call.1} parent=11 // pred_region
          %s222 = ssub.s32 1024, 1024
          %223 = vsyncadd [#allocation9], %s222
          %s224 = sshll.u32 [#allocation8], 4
          %s225 = int_to_ptr.vmem [resolvable:$true] %s224
          %230 = dma.hbm_to_vmem [thread:$0]  %s3, 1024, %s225, [#allocation9], 128, 128, 8
        $region24: #{tpu_custom_call.1} parent=11 // pred_fallthru
          _
        // Predicated region
        $region25: #{tpu_custom_call.1} parent=11 // pred_check
          %p231 = pneg %p130
        $region26: #{tpu_custom_call.1} parent=11 // pred_check_branch
          %233 = sbr.rel (%p231) target = $region28
        $region27: #{tpu_custom_call.1} parent=11 // pred_region
          %s235 = ssub.s32 1024, 1024
          %236 = vsyncadd [#allocation9], %s235
          %s237 = sshll.u32 [#allocation10], 4
          %s238 = int_to_ptr.vmem [resolvable:$true] %s237
          %243 = dma.hbm_to_vmem [thread:$0]  %s4, 1024, %s238, [#allocation9], 128, 128, 8
        $region28: #{tpu_custom_call.1} parent=11 // pred_fallthru
          _
        // Predicated region
        $region29: #{tpu_custom_call.1} parent=11 // pred_check
          %p244 = pneg %p151
        $region30: #{tpu_custom_call.1} parent=11 // pred_check_branch
          %246 = sbr.rel (%p244) target = $region32
        $region31: #{tpu_custom_call.1} parent=11 // pred_region
          _
        $region32: #{tpu_custom_call.1} parent=11 // pred_fallthru
          _
      $region12: #{tpu_custom_call.1} parent=5 // pred_fallthru
        _
      %p247 = scmp.lt.s32.totalorder %s20, 2
      // Predicated region
      $region33: #{tpu_custom_call.1} parent=5 // pred_check
        %p248 = pneg %p247
      $region34: #{tpu_custom_call.1} parent=5 // pred_check_branch
        %250 = sbr.rel (%p248) target = $region36
      $region35: #{tpu_custom_call.1} parent=5 // pred_region
        // Predicated region
        $region37: #{tpu_custom_call.1} parent=35 // pred_check
          %p251 = pneg %p40
        $region38: #{tpu_custom_call.1} parent=35 // pred_check_branch
          %253 = sbr.rel (%p251) target = $region40
        $region39: #{tpu_custom_call.1} parent=35 // pred_region
          %s254 = sand.u32 %s30, 1
          %s255 = scalar_lea.sflag [#allocation3], %s254
          %s256 = sand.u32 %s30, 1
          %s257 = smul.addr %s256, 16
          %s258 = scalar_lea.vmem [#allocation2], %s257
          %s260 = ssub.s32 256, 256
          %261 = vsyncadd %s255, %s260
          %s262 = smul.addr %s20, 2
          %s263 = smul.addr %s262, 128
          %s264 = scalar_lea.hbm %s0, %s263
          %s265 = sshll.u32 %s258, 4
          %s266 = int_to_ptr.vmem [resolvable:$true] %s265
          %271 = dma.hbm_to_vmem [thread:$0]  %s264, 256, %s266, %s255, 128, 128, 8
        $region40: #{tpu_custom_call.1} parent=35 // pred_fallthru
          _
      $region36: #{tpu_custom_call.1} parent=5 // pred_fallthru
        _
      %p272 = scmp.le.s32.totalorder 1, %s20
      %p273 = scmp.lt.s32.totalorder %s20, 3
      %p274 = pnand %p272, %p273
      %p275 = pneg %p274
      // Predicated region
      $region41: #{tpu_custom_call.1} parent=5 // pred_check
        _
      $region42: #{tpu_custom_call.1} parent=5 // pred_check_branch
        %277 = sbr.rel (%p274) target = $region44
      $region43: #{tpu_custom_call.1} parent=5 // pred_region
        %s278 = ssub.s32 %s20, 1
        %s279 = sand.u32 %s33, 1
        %s280 = scalar_lea.sflag [#allocation3], %s279
        %s281 = sand.u32 %s33, 1
        %s282 = smul.addr %s281, 16
        %s283 = scalar_lea.vmem [#allocation2], %s282
        // Predicated region
        $region45: #{tpu_custom_call.1} parent=43 // pred_check
          %p284 = pneg %p46
        $region46: #{tpu_custom_call.1} parent=43 // pred_check_branch
          %286 = sbr.rel (%p284) target = $region48
        $region47: #{tpu_custom_call.1} parent=43 // pred_region
          %287 = dma.done %s280, 256
        $region48: #{tpu_custom_call.1} parent=43 // pred_fallthru
          _
        // Predicated region
        $region49: #{tpu_custom_call.1} parent=43 // pred_check
          %p288 = pneg %p67
        $region50: #{tpu_custom_call.1} parent=43 // pred_check_branch
          %290 = sbr.rel (%p288) target = $region52
        $region51: #{tpu_custom_call.1} parent=43 // pred_region
          %291 = dma.done [#allocation6], 1024
        $region52: #{tpu_custom_call.1} parent=43 // pred_fallthru
          _
        // Predicated region
        $region53: #{tpu_custom_call.1} parent=43 // pred_check
          %p292 = pneg %p88
        $region54: #{tpu_custom_call.1} parent=43 // pred_check_branch
          %294 = sbr.rel (%p292) target = $region56
        $region55: #{tpu_custom_call.1} parent=43 // pred_region
          %295 = dma.done [#allocation6], 1024
        $region56: #{tpu_custom_call.1} parent=43 // pred_fallthru
          _
        // Predicated region
        $region57: #{tpu_custom_call.1} parent=43 // pred_check
          %p296 = pneg %p109
        $region58: #{tpu_custom_call.1} parent=43 // pred_check_branch
          %298 = sbr.rel (%p296) target = $region60
        $region59: #{tpu_custom_call.1} parent=43 // pred_region
          %299 = dma.done [#allocation9], 1024
        $region60: #{tpu_custom_call.1} parent=43 // pred_fallthru
          _
        // Predicated region
        $region61: #{tpu_custom_call.1} parent=43 // pred_check
          %p300 = pneg %p130
        $region62: #{tpu_custom_call.1} parent=43 // pred_check_branch
          %302 = sbr.rel (%p300) target = $region64
        $region63: #{tpu_custom_call.1} parent=43 // pred_region
          %303 = dma.done [#allocation9], 1024
        $region64: #{tpu_custom_call.1} parent=43 // pred_fallthru
          _
        %s304 = sand.u32 %s33, 1
        %s305 = scalar_lea.sflag [#allocation3], %s304
        %s306 = sand.u32 %s33, 1
        %s307 = smul.addr %s306, 16
        %s308 = scalar_lea.vmem [#allocation2], %s307
        %p309 = pneg %p46
        %p310 = pneg %p43
        %p311 = pneg %p67
        %p312 = pneg %p64
        %p313 = pneg %p88
        %p314 = pneg %p85
        %p315 = pneg %p109
        %p316 = pneg %p106
        %p317 = pneg %p130
        %p318 = pneg %p127
        %p319 = pneg %p151
        %p320 = pneg %p148
        %p321 = pneg %p177
        %p322 = pneg %p174
        %s323 = sand.u32 %s164, 1
        %s324 = scalar_lea.sflag [#allocation4], %s323
        %s325 = sand.u32 %s164, 1
        %s326 = smul.addr %s325, 16
        %s327 = scalar_lea.vmem [#allocation11], %s326
        %v328 = vld [vmem:[%s283] sm:$0xff]
        %v329 = vld [vmem:[%s283 + $0x8] sm:$0xff]
        %v330 = vld [vmem:[#allocation5] sm:$0xff]
        %v331 = vld [vmem:[#allocation5 + $0x8] sm:$0xff]
        %v332 = vld [vmem:[#allocation5 + $0x10] sm:$0xff]
        %v333 = vld [vmem:[#allocation5 + $0x18] sm:$0xff]
        %v334 = vld [vmem:[#allocation5 + $0x20] sm:$0xff]
        %v335 = vld [vmem:[#allocation5 + $0x28] sm:$0xff]
        %v336 = vld [vmem:[#allocation5 + $0x30] sm:$0xff]
        %v337 = vld [vmem:[#allocation5 + $0x38] sm:$0xff]
        %vm338 = vcmask 523264
        %v340 = vsel %vm338, %v328, 0
        %v343 = vsel %vm338, %v329, 0
        %345 = vmatprep.subr.mxu0 0.0
        %346 = vmatpush1.msra.mxu0 %v330
        %347 = vmatprep.subr.mxu0 0.0
        %348 = vmatpush1.msra.mxu0 %v331
        %349 = vmatprep.subr.mxu0 0.0
        %350 = vmatpush1.msra.mxu0 %v332
        %351 = vmatprep.subr.mxu0 0.0
        %352 = vmatpush1.msra.mxu0 %v333
        %353 = vmatprep.subr.mxu0 0.0
        %354 = vmatpush1.msra.mxu0 %v334
        %355 = vmatprep.subr.mxu0 0.0
        %356 = vmatpush1.msra.mxu0 %v335
        %357 = vmatprep.subr.mxu0 0.0
        %358 = vmatpush1.msra.mxu0 %v336
        %359 = vmatprep.subr.mxu0 0.0
        %360 = vmatpush1.msra.mxu0 %v337
        %361 = vmatprep.subr.mxu0 0.0
        %362 = vmatpush1.msra.mxu0 0.0
        %363 = vmatprep.subr.mxu0 0.0
        %364 = vmatpush1.msra.mxu0 0.0
        %365 = vmatprep.subr.mxu0 0.0
        %366 = vmatpush1.msra.mxu0 0.0
        %367 = vmatprep.subr.mxu0 0.0
        %368 = vmatpush1.msra.mxu0 0.0
        %369 = vmatprep.subr.mxu0 0.0
        %370 = vmatpush1.msra.mxu0 0.0
        %371 = vmatprep.subr.mxu0 0.0
        %372 = vmatpush1.msra.mxu0 0.0
        %373 = vmatprep.subr.mxu0 0.0
        %374 = vmatpush1.msra.mxu0 0.0
        %375 = vmatprep.subr.mxu0 0.0
        %376 = vmatpush1.msra.mxu0 0.0
        %377 = vmatprep.subr.mxu0 0.0
        %378 = vmatpush1.msra.mxu0 0.0
        %379 = vmatprep.subr.mxu0 0.0
        %380 = vmatpush1.msra.mxu0 0.0
        %381 = vmatprep.subr.mxu0 0.0
        %382 = vmatpush1.msra.mxu0 0.0
        %383 = vmatprep.subr.mxu0 0.0
        %384 = vmatpush1.msra.mxu0 0.0
        %385 = vmatprep.subr.mxu0 0.0
        %386 = vmatpush1.msra.mxu0 0.0
        %387 = vmatprep.subr.mxu0 0.0
        %388 = vmatpush1.msra.mxu0 0.0
        %389 = vmatprep.subr.mxu0 0.0
        %390 = vmatpush1.msra.mxu0 0.0
        %391 = vmatprep.subr.mxu0 0.0
        %392 = vmatpush1.msra.mxu0 0.0
        %393 = vmatprep.subr.mxu0 0.0
        %394 = vmatpush1.msra.mxu0 0.0
        %395 = vmatprep.subr.mxu0 0.0
        %396 = vmatpush1.msra.mxu0 0.0
        %397 = vmatprep.subr.mxu0 0.0
        %398 = vmatpush1.msra.mxu0 0.0
        %399 = vmatprep.subr.mxu0 0.0
        %400 = vmatpush1.msra.mxu0 0.0
        %401 = vmatprep.subr.mxu0 0.0
        %402 = vmatpush1.msra.mxu0 0.0
        %403 = vmatprep.subr.mxu0 0.0
        %404 = vmatpush1.msra.mxu0 0.0
        %405 = vmatprep.subr.mxu0 0.0
        %406 = vmatpush1.msra.mxu0 0.0
        %407 = vmatprep.subr.mxu0 0.0
        %408 = vmatpush1.msra.mxu0 0.0
        %409 = vmatprep.mubr.f32.mxu0 0.0
        %410 = vmatmul.mubr.f32.gmra.mrb[0].mxu0 %v340
        %v411 = vpop.f32.mrb[0].mxu0
        %v412 = vadd.f32 0.0, %v411
        %v413 = vpop.f32.mrb[0].mxu0
        %414 = vmatprep.mubr.f32.mxu0 0.0
        %415 = vmatmul.mubr.f32.gmra.mrb[0].mxu0 %v343
        %v416 = vpop.f32.mrb[0].mxu0
        %v417 = vadd.f32 0.0, %v416
        %v418 = vpop.f32.mrb[0].mxu0
        %419 = vdwg.mxu0
        %v420 = vld [vmem:[#allocation7] sm:$0xff]
        %v421 = vld [vmem:[#allocation7 + $0x8] sm:$0xff]
        %v422 = vld [vmem:[#allocation7 + $0x10] sm:$0xff]
        %v423 = vld [vmem:[#allocation7 + $0x18] sm:$0xff]
        %v424 = vld [vmem:[#allocation7 + $0x20] sm:$0xff]
        %v425 = vld [vmem:[#allocation7 + $0x28] sm:$0xff]
        %v426 = vld [vmem:[#allocation7 + $0x30] sm:$0xff]
        %v427 = vld [vmem:[#allocation7 + $0x38] sm:$0xff]
        %428 = vmatprep.subr.mxu0 0.0
        %429 = vmatpush1.msra.mxu0 %v420
        %430 = vmatprep.subr.mxu0 0.0
        %431 = vmatpush1.msra.mxu0 %v421
        %432 = vmatprep.subr.mxu0 0.0
        %433 = vmatpush1.msra.mxu0 %v422
        %434 = vmatprep.subr.mxu0 0.0
        %435 = vmatpush1.msra.mxu0 %v423
        %436 = vmatprep.subr.mxu0 0.0
        %437 = vmatpush1.msra.mxu0 %v424
        %438 = vmatprep.subr.mxu0 0.0
        %439 = vmatpush1.msra.mxu0 %v425
        %440 = vmatprep.subr.mxu0 0.0
        %441 = vmatpush1.msra.mxu0 %v426
        %442 = vmatprep.subr.mxu0 0.0
        %443 = vmatpush1.msra.mxu0 %v427
        %444 = vmatprep.subr.mxu0 0.0
        %445 = vmatpush1.msra.mxu0 0.0
        %446 = vmatprep.subr.mxu0 0.0
        %447 = vmatpush1.msra.mxu0 0.0
        %448 = vmatprep.subr.mxu0 0.0
        %449 = vmatpush1.msra.mxu0 0.0
        %450 = vmatprep.subr.mxu0 0.0
        %451 = vmatpush1.msra.mxu0 0.0
        %452 = vmatprep.subr.mxu0 0.0
        %453 = vmatpush1.msra.mxu0 0.0
        %454 = vmatprep.subr.mxu0 0.0
        %455 = vmatpush1.msra.mxu0 0.0
        %456 = vmatprep.subr.mxu0 0.0
        %457 = vmatpush1.msra.mxu0 0.0
        %458 = vmatprep.subr.mxu0 0.0
        %459 = vmatpush1.msra.mxu0 0.0
        %460 = vmatprep.subr.mxu0 0.0
        %461 = vmatpush1.msra.mxu0 0.0
        %462 = vmatprep.subr.mxu0 0.0
        %463 = vmatpush1.msra.mxu0 0.0
        %464 = vmatprep.subr.mxu0 0.0
        %465 = vmatpush1.msra.mxu0 0.0
        %466 = vmatprep.subr.mxu0 0.0
        %467 = vmatpush1.msra.mxu0 0.0
        %468 = vmatprep.subr.mxu0 0.0
        %469 = vmatpush1.msra.mxu0 0.0
        %470 = vmatprep.subr.mxu0 0.0
        %471 = vmatpush1.msra.mxu0 0.0
        %472 = vmatprep.subr.mxu0 0.0
        %473 = vmatpush1.msra.mxu0 0.0
        %474 = vmatprep.subr.mxu0 0.0
        %475 = vmatpush1.msra.mxu0 0.0
        %476 = vmatprep.subr.mxu0 0.0
        %477 = vmatpush1.msra.mxu0 0.0
        %478 = vmatprep.subr.mxu0 0.0
        %479 = vmatpush1.msra.mxu0 0.0
        %480 = vmatprep.subr.mxu0 0.0
        %481 = vmatpush1.msra.mxu0 0.0
        %482 = vmatprep.subr.mxu0 0.0
        %483 = vmatpush1.msra.mxu0 0.0
        %484 = vmatprep.subr.mxu0 0.0
        %485 = vmatpush1.msra.mxu0 0.0
        %486 = vmatprep.subr.mxu0 0.0
        %487 = vmatpush1.msra.mxu0 0.0
        %488 = vmatprep.subr.mxu0 0.0
        %489 = vmatpush1.msra.mxu0 0.0
        %490 = vmatprep.subr.mxu0 0.0
        %491 = vmatpush1.msra.mxu0 0.0
        %492 = vmatprep.mubr.f32.mxu0 0.0
        %493 = vmatmul.mubr.f32.gmra.mrb[0].mxu0 %v340
        %v494 = vpop.f32.mrb[0].mxu0
        %v495 = vadd.f32 0.0, %v494
        %v496 = vpop.f32.mrb[0].mxu0
        %497 = vmatprep.mubr.f32.mxu0 0.0
        %498 = vmatmul.mubr.f32.gmra.mrb[0].mxu0 %v343
        %v499 = vpop.f32.mrb[0].mxu0
        %v500 = vadd.f32 0.0, %v499
        %v501 = vpop.f32.mrb[0].mxu0
        %502 = vdwg.mxu0
        %v503 = vld [vmem:[#allocation8] sm:$0xff]
        %v504 = vld [vmem:[#allocation8 + $0x8] sm:$0xff]
        %v505 = vld [vmem:[#allocation8 + $0x10] sm:$0xff]
        %v506 = vld [vmem:[#allocation8 + $0x18] sm:$0xff]
        %v507 = vld [vmem:[#allocation8 + $0x20] sm:$0xff]
        %v508 = vld [vmem:[#allocation8 + $0x28] sm:$0xff]
        %v509 = vld [vmem:[#allocation8 + $0x30] sm:$0xff]
        %v510 = vld [vmem:[#allocation8 + $0x38] sm:$0xff]
        %511 = vmatprep.subr.mxu0 0.0
        %512 = vmatpush1.msra.mxu0 %v503
        %513 = vmatprep.subr.mxu0 0.0
        %514 = vmatpush1.msra.mxu0 %v504
        %515 = vmatprep.subr.mxu0 0.0
        %516 = vmatpush1.msra.mxu0 %v505
        %517 = vmatprep.subr.mxu0 0.0
        %518 = vmatpush1.msra.mxu0 %v506
        %519 = vmatprep.subr.mxu0 0.0
        %520 = vmatpush1.msra.mxu0 %v507
        %521 = vmatprep.subr.mxu0 0.0
        %522 = vmatpush1.msra.mxu0 %v508
        %523 = vmatprep.subr.mxu0 0.0
        %524 = vmatpush1.msra.mxu0 %v509
        %525 = vmatprep.subr.mxu0 0.0
        %526 = vmatpush1.msra.mxu0 %v510
        %527 = vmatprep.subr.mxu0 0.0
        %528 = vmatpush1.msra.mxu0 0.0
        %529 = vmatprep.subr.mxu0 0.0
        %530 = vmatpush1.msra.mxu0 0.0
        %531 = vmatprep.subr.mxu0 0.0
        %532 = vmatpush1.msra.mxu0 0.0
        %533 = vmatprep.subr.mxu0 0.0
        %534 = vmatpush1.msra.mxu0 0.0
        %535 = vmatprep.subr.mxu0 0.0
        %536 = vmatpush1.msra.mxu0 0.0
        %537 = vmatprep.subr.mxu0 0.0
        %538 = vmatpush1.msra.mxu0 0.0
        %539 = vmatprep.subr.mxu0 0.0
        %540 = vmatpush1.msra.mxu0 0.0
        %541 = vmatprep.subr.mxu0 0.0
        %542 = vmatpush1.msra.mxu0 0.0
        %543 = vmatprep.subr.mxu0 0.0
        %544 = vmatpush1.msra.mxu0 0.0
        %545 = vmatprep.subr.mxu0 0.0
        %546 = vmatpush1.msra.mxu0 0.0
        %547 = vmatprep.subr.mxu0 0.0
        %548 = vmatpush1.msra.mxu0 0.0
        %549 = vmatprep.subr.mxu0 0.0
        %550 = vmatpush1.msra.mxu0 0.0
        %551 = vmatprep.subr.mxu0 0.0
        %552 = vmatpush1.msra.mxu0 0.0
        %553 = vmatprep.subr.mxu0 0.0
        %554 = vmatpush1.msra.mxu0 0.0
        %555 = vmatprep.subr.mxu0 0.0
        %556 = vmatpush1.msra.mxu0 0.0
        %557 = vmatprep.subr.mxu0 0.0
        %558 = vmatpush1.msra.mxu0 0.0
        %559 = vmatprep.subr.mxu0 0.0
        %560 = vmatpush1.msra.mxu0 0.0
        %561 = vmatprep.subr.mxu0 0.0
        %562 = vmatpush1.msra.mxu0 0.0
        %563 = vmatprep.subr.mxu0 0.0
        %564 = vmatpush1.msra.mxu0 0.0
        %565 = vmatprep.subr.mxu0 0.0
        %566 = vmatpush1.msra.mxu0 0.0
        %567 = vmatprep.subr.mxu0 0.0
        %568 = vmatpush1.msra.mxu0 0.0
        %569 = vmatprep.subr.mxu0 0.0
        %570 = vmatpush1.msra.mxu0 0.0
        %571 = vmatprep.subr.mxu0 0.0
        %572 = vmatpush1.msra.mxu0 0.0
        %573 = vmatprep.subr.mxu0 0.0
        %574 = vmatpush1.msra.mxu0 0.0
        %575 = vmatprep.mubr.f32.mxu0 0.0
        %576 = vmatmul.mubr.f32.gmra.mrb[0].mxu0 %v340
        %v577 = vpop.f32.mrb[0].mxu0
        %v578 = vadd.f32 0.0, %v577
        %v579 = vpop.f32.mrb[0].mxu0
        %580 = vmatprep.mubr.f32.mxu0 0.0
        %581 = vmatmul.mubr.f32.gmra.mrb[0].mxu0 %v343
        %v582 = vpop.f32.mrb[0].mxu0
        %v583 = vadd.f32 0.0, %v582
        %v584 = vpop.f32.mrb[0].mxu0
        %585 = vdwg.mxu0
        %588 = vrot.lane.b32.xlu0 %v412, 112
        %v589 = vpop.permute.xlu0 %588
        %590 = vrot.lane.b32.xlu0 %v417, 112
        %v591 = vpop.permute.xlu0 %590
        %594 = vrot.lane.b32.xlu0 %v412, 96
        %v595 = vpop.permute.xlu0 %594
        %596 = vrot.lane.b32.xlu0 %v417, 96
        %v597 = vpop.permute.xlu0 %596
        %600 = vrot.lane.b32.xlu0 %v412, 80
        %v601 = vpop.permute.xlu0 %600
        %602 = vrot.lane.b32.xlu0 %v417, 80
        %v603 = vpop.permute.xlu0 %602
        %v606 = vcombine.low %v412, %v595
        %v607 = vcombine.high %v412, %v595
        %v609 = vunpack.c.l.s4 1983009808
        %v610 = vunpack.c.0.s8 %v609
        %v611 = vlaneseq
        %v612 = vshrl.u32 %v611, 7
        %v613 = vsub.s32 %v610, %v612
        %v614 = vrot.slane %v606, %v613
        %v616 = vunpack.c.l.s4 1983009808
        %v617 = vunpack.c.0.s8 %v616
        %v618 = vlaneseq
        %v619 = vshrl.u32 %v618, 7
        %v620 = vsub.s32 %v617, %v619
        %v621 = vrot.slane %v607, %v620
        %v622 = vcombine.low %v589, %v601
        %v623 = vcombine.high %v589, %v601
        %v625 = vunpack.c.l.s4 1983009808
        %v626 = vunpack.c.0.s8 %v625
        %v627 = vlaneseq
        %v628 = vshrl.u32 %v627, 7
        %v629 = vsub.s32 %v626, %v628
        %v630 = vrot.slane %v622, %v629
        %v632 = vunpack.c.l.s4 1983009808
        %v633 = vunpack.c.0.s8 %v632
        %v634 = vlaneseq
        %v635 = vshrl.u32 %v634, 7
        %v636 = vsub.s32 %v633, %v635
        %v637 = vrot.slane %v623, %v636
        %v638 = vcombine.low %v614, %v630
        %v639 = vcombine.high %v614, %v630
        %v641 = vunpack.c.l.s4 1934713408
        %v642 = vunpack.c.0.s8 %v641
        %v643 = vlaneseq
        %v644 = vshrl.u32 %v643, 7
        %v645 = vsub.s32 %v642, %v644
        %v646 = vrot.slane %v638, %v645
        %v648 = vunpack.c.l.s4 1934713408
        %v649 = vunpack.c.0.s8 %v648
        %v650 = vlaneseq
        %v651 = vshrl.u32 %v650, 7
        %v652 = vsub.s32 %v649, %v651
        %v653 = vrot.slane %v639, %v652
        %v654 = vcombine.low %v621, %v637
        %v655 = vcombine.high %v621, %v637
        %v657 = vunpack.c.l.s4 1934713408
        %v658 = vunpack.c.0.s8 %v657
        %v659 = vlaneseq
        %v660 = vshrl.u32 %v659, 7
        %v661 = vsub.s32 %v658, %v660
        %v662 = vrot.slane %v654, %v661
        %v664 = vunpack.c.l.s4 1934713408
        %v665 = vunpack.c.0.s8 %v664
        %v666 = vlaneseq
        %v667 = vshrl.u32 %v666, 7
        %v668 = vsub.s32 %v665, %v667
        %v669 = vrot.slane %v655, %v668
        %v670 = vcombine.high %v646, 0.0
        %v671 = vcombine.high %v653, 0.0
        %v672 = vcombine.high %v662, 0.0
        %v673 = vcombine.high %v669, 0.0
        %v674 = vcombine.low %v417, %v597
        %v675 = vcombine.high %v417, %v597
        %v677 = vunpack.c.l.s4 1983009808
        %v678 = vunpack.c.0.s8 %v677
        %v679 = vlaneseq
        %v680 = vshrl.u32 %v679, 7
        %v681 = vsub.s32 %v678, %v680
        %v682 = vrot.slane %v674, %v681
        %v684 = vunpack.c.l.s4 1983009808
        %v685 = vunpack.c.0.s8 %v684
        %v686 = vlaneseq
        %v687 = vshrl.u32 %v686, 7
        %v688 = vsub.s32 %v685, %v687
        %v689 = vrot.slane %v675, %v688
        %v690 = vcombine.low %v591, %v603
        %v691 = vcombine.high %v591, %v603
        %v693 = vunpack.c.l.s4 1983009808
        %v694 = vunpack.c.0.s8 %v693
        %v695 = vlaneseq
        %v696 = vshrl.u32 %v695, 7
        %v697 = vsub.s32 %v694, %v696
        %v698 = vrot.slane %v690, %v697
        %v700 = vunpack.c.l.s4 1983009808
        %v701 = vunpack.c.0.s8 %v700
        %v702 = vlaneseq
        %v703 = vshrl.u32 %v702, 7
        %v704 = vsub.s32 %v701, %v703
        %v705 = vrot.slane %v691, %v704
        %v706 = vcombine.low %v682, %v698
        %v707 = vcombine.high %v682, %v698
        %v709 = vunpack.c.l.s4 1934713408
        %v710 = vunpack.c.0.s8 %v709
        %v711 = vlaneseq
        %v712 = vshrl.u32 %v711, 7
        %v713 = vsub.s32 %v710, %v712
        %v714 = vrot.slane %v706, %v713
        %v716 = vunpack.c.l.s4 1934713408
        %v717 = vunpack.c.0.s8 %v716
        %v718 = vlaneseq
        %v719 = vshrl.u32 %v718, 7
        %v720 = vsub.s32 %v717, %v719
        %v721 = vrot.slane %v707, %v720
        %v722 = vcombine.low %v689, %v705
        %v723 = vcombine.high %v689, %v705
        %v725 = vunpack.c.l.s4 1934713408
        %v726 = vunpack.c.0.s8 %v725
        %v727 = vlaneseq
        %v728 = vshrl.u32 %v727, 7
        %v729 = vsub.s32 %v726, %v728
        %v730 = vrot.slane %v722, %v729
        %v732 = vunpack.c.l.s4 1934713408
        %v733 = vunpack.c.0.s8 %v732
        %v734 = vlaneseq
        %v735 = vshrl.u32 %v734, 7
        %v736 = vsub.s32 %v733, %v735
        %v737 = vrot.slane %v723, %v736
        %v738 = vcombine.high %v714, 0.0
        %v739 = vcombine.high %v721, 0.0
        %v740 = vcombine.high %v730, 0.0
        %v741 = vcombine.high %v737, 0.0
        %v742 = vcombine.low %v646, %v653
        %v744 = vunpack.c.l.s4 1983009808
        %v745 = vunpack.c.0.s8 %v744
        %v746 = vlaneseq
        %v747 = vshrl.u32 %v746, 7
        %v748 = vsub.s32 %v745, %v747
        %v749 = vrot.slane %v742, %v748
        %v750 = vcombine.low %v670, %v671
        %v752 = vunpack.c.l.s4 1983009808
        %v753 = vunpack.c.0.s8 %v752
        %v754 = vlaneseq
        %v755 = vshrl.u32 %v754, 7
        %v756 = vsub.s32 %v753, %v755
        %v757 = vrot.slane %v750, %v756
        %v758 = vcombine.low %v662, %v669
        %v760 = vunpack.c.l.s4 1983009808
        %v761 = vunpack.c.0.s8 %v760
        %v762 = vlaneseq
        %v763 = vshrl.u32 %v762, 7
        %v764 = vsub.s32 %v761, %v763
        %v765 = vrot.slane %v758, %v764
        %v766 = vcombine.low %v672, %v673
        %v768 = vunpack.c.l.s4 1983009808
        %v769 = vunpack.c.0.s8 %v768
        %v770 = vlaneseq
        %v771 = vshrl.u32 %v770, 7
        %v772 = vsub.s32 %v769, %v771
        %v773 = vrot.slane %v766, %v772
        %v774 = vcombine.low %v749, %v757
        %v775 = vcombine.high %v749, %v757
        %v777 = vunpack.c.l.s4 1934713408
        %v778 = vunpack.c.0.s8 %v777
        %v779 = vlaneseq
        %v780 = vshrl.u32 %v779, 7
        %v781 = vsub.s32 %v778, %v780
        %v782 = vrot.slane %v774, %v781
        %v784 = vunpack.c.l.s4 1934713408
        %v785 = vunpack.c.0.s8 %v784
        %v786 = vlaneseq
        %v787 = vshrl.u32 %v786, 7
        %v788 = vsub.s32 %v785, %v787
        %v789 = vrot.slane %v775, %v788
        %v790 = vcombine.low %v765, %v773
        %v791 = vcombine.high %v765, %v773
        %v793 = vunpack.c.l.s4 1934713408
        %v794 = vunpack.c.0.s8 %v793
        %v795 = vlaneseq
        %v796 = vshrl.u32 %v795, 7
        %v797 = vsub.s32 %v794, %v796
        %v798 = vrot.slane %v790, %v797
        %v800 = vunpack.c.l.s4 1934713408
        %v801 = vunpack.c.0.s8 %v800
        %v802 = vlaneseq
        %v803 = vshrl.u32 %v802, 7
        %v804 = vsub.s32 %v801, %v803
        %v805 = vrot.slane %v791, %v804
        %v806 = vcombine.low %v782, %v798
        %v807 = vcombine.high %v782, %v798
        %v808 = vcombine.low %v789, %v805
        %v809 = vcombine.high %v789, %v805
        %v810 = vcombine.low %v714, %v721
        %v812 = vunpack.c.l.s4 1983009808
        %v813 = vunpack.c.0.s8 %v812
        %v814 = vlaneseq
        %v815 = vshrl.u32 %v814, 7
        %v816 = vsub.s32 %v813, %v815
        %v817 = vrot.slane %v810, %v816
        %v818 = vcombine.low %v738, %v739
        %v820 = vunpack.c.l.s4 1983009808
        %v821 = vunpack.c.0.s8 %v820
        %v822 = vlaneseq
        %v823 = vshrl.u32 %v822, 7
        %v824 = vsub.s32 %v821, %v823
        %v825 = vrot.slane %v818, %v824
        %v826 = vcombine.low %v730, %v737
        %v828 = vunpack.c.l.s4 1983009808
        %v829 = vunpack.c.0.s8 %v828
        %v830 = vlaneseq
        %v831 = vshrl.u32 %v830, 7
        %v832 = vsub.s32 %v829, %v831
        %v833 = vrot.slane %v826, %v832
        %v834 = vcombine.low %v740, %v741
        %v836 = vunpack.c.l.s4 1983009808
        %v837 = vunpack.c.0.s8 %v836
        %v838 = vlaneseq
        %v839 = vshrl.u32 %v838, 7
        %v840 = vsub.s32 %v837, %v839
        %v841 = vrot.slane %v834, %v840
        %v842 = vcombine.low %v817, %v825
        %v843 = vcombine.high %v817, %v825
        %v845 = vunpack.c.l.s4 1934713408
        %v846 = vunpack.c.0.s8 %v845
        %v847 = vlaneseq
        %v848 = vshrl.u32 %v847, 7
        %v849 = vsub.s32 %v846, %v848
        %v850 = vrot.slane %v842, %v849
        %v852 = vunpack.c.l.s4 1934713408
        %v853 = vunpack.c.0.s8 %v852
        %v854 = vlaneseq
        %v855 = vshrl.u32 %v854, 7
        %v856 = vsub.s32 %v853, %v855
        %v857 = vrot.slane %v843, %v856
        %v858 = vcombine.low %v833, %v841
        %v859 = vcombine.high %v833, %v841
        %v861 = vunpack.c.l.s4 1934713408
        %v862 = vunpack.c.0.s8 %v861
        %v863 = vlaneseq
        %v864 = vshrl.u32 %v863, 7
        %v865 = vsub.s32 %v862, %v864
        %v866 = vrot.slane %v858, %v865
        %v868 = vunpack.c.l.s4 1934713408
        %v869 = vunpack.c.0.s8 %v868
        %v870 = vlaneseq
        %v871 = vshrl.u32 %v870, 7
        %v872 = vsub.s32 %v869, %v871
        %v873 = vrot.slane %v859, %v872
        %v874 = vcombine.low %v850, %v866
        %v875 = vcombine.high %v850, %v866
        %v876 = vcombine.low %v857, %v873
        %v877 = vcombine.high %v857, %v873
        %880 = vrot.lane.b32.xlu0 %v495, 112
        %v881 = vpop.permute.xlu0 %880
        %882 = vrot.lane.b32.xlu0 %v500, 112
        %v883 = vpop.permute.xlu0 %882
        %886 = vrot.lane.b32.xlu0 %v495, 96
        %v887 = vpop.permute.xlu0 %886
        %888 = vrot.lane.b32.xlu0 %v500, 96
        %v889 = vpop.permute.xlu0 %888
        %892 = vrot.lane.b32.xlu0 %v495, 80
        %v893 = vpop.permute.xlu0 %892
        %894 = vrot.lane.b32.xlu0 %v500, 80
        %v895 = vpop.permute.xlu0 %894
        %v898 = vcombine.low %v495, %v887
        %v899 = vcombine.high %v495, %v887
        %v901 = vunpack.c.l.s4 1983009808
        %v902 = vunpack.c.0.s8 %v901
        %v903 = vlaneseq
        %v904 = vshrl.u32 %v903, 7
        %v905 = vsub.s32 %v902, %v904
        %v906 = vrot.slane %v898, %v905
        %v908 = vunpack.c.l.s4 1983009808
        %v909 = vunpack.c.0.s8 %v908
        %v910 = vlaneseq
        %v911 = vshrl.u32 %v910, 7
        %v912 = vsub.s32 %v909, %v911
        %v913 = vrot.slane %v899, %v912
        %v914 = vcombine.low %v881, %v893
        %v915 = vcombine.high %v881, %v893
        %v917 = vunpack.c.l.s4 1983009808
        %v918 = vunpack.c.0.s8 %v917
        %v919 = vlaneseq
        %v920 = vshrl.u32 %v919, 7
        %v921 = vsub.s32 %v918, %v920
        %v922 = vrot.slane %v914, %v921
        %v924 = vunpack.c.l.s4 1983009808
        %v925 = vunpack.c.0.s8 %v924
        %v926 = vlaneseq
        %v927 = vshrl.u32 %v926, 7
        %v928 = vsub.s32 %v925, %v927
        %v929 = vrot.slane %v915, %v928
        %v930 = vcombine.low %v906, %v922
        %v931 = vcombine.high %v906, %v922
        %v933 = vunpack.c.l.s4 1934713408
        %v934 = vunpack.c.0.s8 %v933
        %v935 = vlaneseq
        %v936 = vshrl.u32 %v935, 7
        %v937 = vsub.s32 %v934, %v936
        %v938 = vrot.slane %v930, %v937
        %v940 = vunpack.c.l.s4 1934713408
        %v941 = vunpack.c.0.s8 %v940
        %v942 = vlaneseq
        %v943 = vshrl.u32 %v942, 7
        %v944 = vsub.s32 %v941, %v943
        %v945 = vrot.slane %v931, %v944
        %v946 = vcombine.low %v913, %v929
        %v947 = vcombine.high %v913, %v929
        %v949 = vunpack.c.l.s4 1934713408
        %v950 = vunpack.c.0.s8 %v949
        %v951 = vlaneseq
        %v952 = vshrl.u32 %v951, 7
        %v953 = vsub.s32 %v950, %v952
        %v954 = vrot.slane %v946, %v953
        %v956 = vunpack.c.l.s4 1934713408
        %v957 = vunpack.c.0.s8 %v956
        %v958 = vlaneseq
        %v959 = vshrl.u32 %v958, 7
        %v960 = vsub.s32 %v957, %v959
        %v961 = vrot.slane %v947, %v960
        %v962 = vcombine.high %v938, 0.0
        %v963 = vcombine.high %v945, 0.0
        %v964 = vcombine.high %v954, 0.0
        %v965 = vcombine.high %v961, 0.0
        %v966 = vcombine.low %v500, %v889
        %v967 = vcombine.high %v500, %v889
        %v969 = vunpack.c.l.s4 1983009808
        %v970 = vunpack.c.0.s8 %v969
        %v971 = vlaneseq
        %v972 = vshrl.u32 %v971, 7
        %v973 = vsub.s32 %v970, %v972
        %v974 = vrot.slane %v966, %v973
        %v976 = vunpack.c.l.s4 1983009808
        %v977 = vunpack.c.0.s8 %v976
        %v978 = vlaneseq
        %v979 = vshrl.u32 %v978, 7
        %v980 = vsub.s32 %v977, %v979
        %v981 = vrot.slane %v967, %v980
        %v982 = vcombine.low %v883, %v895
        %v983 = vcombine.high %v883, %v895
        %v985 = vunpack.c.l.s4 1983009808
        %v986 = vunpack.c.0.s8 %v985
        %v987 = vlaneseq
        %v988 = vshrl.u32 %v987, 7
        %v989 = vsub.s32 %v986, %v988
        %v990 = vrot.slane %v982, %v989
        %v992 = vunpack.c.l.s4 1983009808
        %v993 = vunpack.c.0.s8 %v992
        %v994 = vlaneseq
        %v995 = vshrl.u32 %v994, 7
        %v996 = vsub.s32 %v993, %v995
        %v997 = vrot.slane %v983, %v996
        %v998 = vcombine.low %v974, %v990
        %v999 = vcombine.high %v974, %v990
        %v1001 = vunpack.c.l.s4 1934713408
        %v1002 = vunpack.c.0.s8 %v1001
        %v1003 = vlaneseq
        %v1004 = vshrl.u32 %v1003, 7
        %v1005 = vsub.s32 %v1002, %v1004
        %v1006 = vrot.slane %v998, %v1005
        %v1008 = vunpack.c.l.s4 1934713408
        %v1009 = vunpack.c.0.s8 %v1008
        %v1010 = vlaneseq
        %v1011 = vshrl.u32 %v1010, 7
        %v1012 = vsub.s32 %v1009, %v1011
        %v1013 = vrot.slane %v999, %v1012
        %v1014 = vcombine.low %v981, %v997
        %v1015 = vcombine.high %v981, %v997
        %v1017 = vunpack.c.l.s4 1934713408
        %v1018 = vunpack.c.0.s8 %v1017
        %v1019 = vlaneseq
        %v1020 = vshrl.u32 %v1019, 7
        %v1021 = vsub.s32 %v1018, %v1020
        %v1022 = vrot.slane %v1014, %v1021
        %v1024 = vunpack.c.l.s4 1934713408
        %v1025 = vunpack.c.0.s8 %v1024
        %v1026 = vlaneseq
        %v1027 = vshrl.u32 %v1026, 7
        %v1028 = vsub.s32 %v1025, %v1027
        %v1029 = vrot.slane %v1015, %v1028
        %v1030 = vcombine.high %v1006, 0.0
        %v1031 = vcombine.high %v1013, 0.0
        %v1032 = vcombine.high %v1022, 0.0
        %v1033 = vcombine.high %v1029, 0.0
        %v1034 = vcombine.low %v938, %v945
        %v1036 = vunpack.c.l.s4 1983009808
        %v1037 = vunpack.c.0.s8 %v1036
        %v1038 = vlaneseq
        %v1039 = vshrl.u32 %v1038, 7
        %v1040 = vsub.s32 %v1037, %v1039
        %v1041 = vrot.slane %v1034, %v1040
        %v1042 = vcombine.low %v962, %v963
        %v1044 = vunpack.c.l.s4 1983009808
        %v1045 = vunpack.c.0.s8 %v1044
        %v1046 = vlaneseq
        %v1047 = vshrl.u32 %v1046, 7
        %v1048 = vsub.s32 %v1045, %v1047
        %v1049 = vrot.slane %v1042, %v1048
        %v1050 = vcombine.low %v954, %v961
        %v1052 = vunpack.c.l.s4 1983009808
        %v1053 = vunpack.c.0.s8 %v1052
        %v1054 = vlaneseq
        %v1055 = vshrl.u32 %v1054, 7
        %v1056 = vsub.s32 %v1053, %v1055
        %v1057 = vrot.slane %v1050, %v1056
        %v1058 = vcombine.low %v964, %v965
        %v1060 = vunpack.c.l.s4 1983009808
        %v1061 = vunpack.c.0.s8 %v1060
        %v1062 = vlaneseq
        %v1063 = vshrl.u32 %v1062, 7
        %v1064 = vsub.s32 %v1061, %v1063
        %v1065 = vrot.slane %v1058, %v1064
        %v1066 = vcombine.low %v1041, %v1049
        %v1067 = vcombine.high %v1041, %v1049
        %v1069 = vunpack.c.l.s4 1934713408
        %v1070 = vunpack.c.0.s8 %v1069
        %v1071 = vlaneseq
        %v1072 = vshrl.u32 %v1071, 7
        %v1073 = vsub.s32 %v1070, %v1072
        %v1074 = vrot.slane %v1066, %v1073
        %v1076 = vunpack.c.l.s4 1934713408
        %v1077 = vunpack.c.0.s8 %v1076
        %v1078 = vlaneseq
        %v1079 = vshrl.u32 %v1078, 7
        %v1080 = vsub.s32 %v1077, %v1079
        %v1081 = vrot.slane %v1067, %v1080
        %v1082 = vcombine.low %v1057, %v1065
        %v1083 = vcombine.high %v1057, %v1065
        %v1085 = vunpack.c.l.s4 1934713408
        %v1086 = vunpack.c.0.s8 %v1085
        %v1087 = vlaneseq
        %v1088 = vshrl.u32 %v1087, 7
        %v1089 = vsub.s32 %v1086, %v1088
        %v1090 = vrot.slane %v1082, %v1089
        %v1092 = vunpack.c.l.s4 1934713408
        %v1093 = vunpack.c.0.s8 %v1092
        %v1094 = vlaneseq
        %v1095 = vshrl.u32 %v1094, 7
        %v1096 = vsub.s32 %v1093, %v1095
        %v1097 = vrot.slane %v1083, %v1096
        %v1098 = vcombine.low %v1074, %v1090
        %v1099 = vcombine.high %v1074, %v1090
        %v1100 = vcombine.low %v1081, %v1097
        %v1101 = vcombine.high %v1081, %v1097
        %v1102 = vcombine.low %v1006, %v1013
        %v1104 = vunpack.c.l.s4 1983009808
        %v1105 = vunpack.c.0.s8 %v1104
        %v1106 = vlaneseq
        %v1107 = vshrl.u32 %v1106, 7
        %v1108 = vsub.s32 %v1105, %v1107
        %v1109 = vrot.slane %v1102, %v1108
        %v1110 = vcombine.low %v1030, %v1031
        %v1112 = vunpack.c.l.s4 1983009808
        %v1113 = vunpack.c.0.s8 %v1112
        %v1114 = vlaneseq
        %v1115 = vshrl.u32 %v1114, 7
        %v1116 = vsub.s32 %v1113, %v1115
        %v1117 = vrot.slane %v1110, %v1116
        %v1118 = vcombine.low %v1022, %v1029
        %v1120 = vunpack.c.l.s4 1983009808
        %v1121 = vunpack.c.0.s8 %v1120
        %v1122 = vlaneseq
        %v1123 = vshrl.u32 %v1122, 7
        %v1124 = vsub.s32 %v1121, %v1123
        %v1125 = vrot.slane %v1118, %v1124
        %v1126 = vcombine.low %v1032, %v1033
        %v1128 = vunpack.c.l.s4 1983009808
        %v1129 = vunpack.c.0.s8 %v1128
        %v1130 = vlaneseq
        %v1131 = vshrl.u32 %v1130, 7
        %v1132 = vsub.s32 %v1129, %v1131
        %v1133 = vrot.slane %v1126, %v1132
        %v1134 = vcombine.low %v1109, %v1117
        %v1135 = vcombine.high %v1109, %v1117
        %v1137 = vunpack.c.l.s4 1934713408
        %v1138 = vunpack.c.0.s8 %v1137
        %v1139 = vlaneseq
        %v1140 = vshrl.u32 %v1139, 7
        %v1141 = vsub.s32 %v1138, %v1140
        %v1142 = vrot.slane %v1134, %v1141
        %v1144 = vunpack.c.l.s4 1934713408
        %v1145 = vunpack.c.0.s8 %v1144
        %v1146 = vlaneseq
        %v1147 = vshrl.u32 %v1146, 7
        %v1148 = vsub.s32 %v1145, %v1147
        %v1149 = vrot.slane %v1135, %v1148
        %v1150 = vcombine.low %v1125, %v1133
        %v1151 = vcombine.high %v1125, %v1133
        %v1153 = vunpack.c.l.s4 1934713408
        %v1154 = vunpack.c.0.s8 %v1153
        %v1155 = vlaneseq
        %v1156 = vshrl.u32 %v1155, 7
        %v1157 = vsub.s32 %v1154, %v1156
        %v1158 = vrot.slane %v1150, %v1157
        %v1160 = vunpack.c.l.s4 1934713408
        %v1161 = vunpack.c.0.s8 %v1160
        %v1162 = vlaneseq
        %v1163 = vshrl.u32 %v1162, 7
        %v1164 = vsub.s32 %v1161, %v1163
        %v1165 = vrot.slane %v1151, %v1164
        %v1166 = vcombine.low %v1142, %v1158
        %v1167 = vcombine.high %v1142, %v1158
        %v1168 = vcombine.low %v1149, %v1165
        %v1169 = vcombine.high %v1149, %v1165
        %1172 = vrot.lane.b32.xlu0 %v578, 112
        %v1173 = vpop.permute.xlu0 %1172
        %1174 = vrot.lane.b32.xlu0 %v583, 112
        %v1175 = vpop.permute.xlu0 %1174
        %1178 = vrot.lane.b32.xlu0 %v578, 96
        %v1179 = vpop.permute.xlu0 %1178
        %1180 = vrot.lane.b32.xlu0 %v583, 96
        %v1181 = vpop.permute.xlu0 %1180
        %1184 = vrot.lane.b32.xlu0 %v578, 80
        %v1185 = vpop.permute.xlu0 %1184
        %1186 = vrot.lane.b32.xlu0 %v583, 80
        %v1187 = vpop.permute.xlu0 %1186
        %v1190 = vcombine.low %v578, %v1179
        %v1191 = vcombine.high %v578, %v1179
        %v1193 = vunpack.c.l.s4 1983009808
        %v1194 = vunpack.c.0.s8 %v1193
        %v1195 = vlaneseq
        %v1196 = vshrl.u32 %v1195, 7
        %v1197 = vsub.s32 %v1194, %v1196
        %v1198 = vrot.slane %v1190, %v1197
        %v1200 = vunpack.c.l.s4 1983009808
        %v1201 = vunpack.c.0.s8 %v1200
        %v1202 = vlaneseq
        %v1203 = vshrl.u32 %v1202, 7
        %v1204 = vsub.s32 %v1201, %v1203
        %v1205 = vrot.slane %v1191, %v1204
        %v1206 = vcombine.low %v1173, %v1185
        %v1207 = vcombine.high %v1173, %v1185
        %v1209 = vunpack.c.l.s4 1983009808
        %v1210 = vunpack.c.0.s8 %v1209
        %v1211 = vlaneseq
        %v1212 = vshrl.u32 %v1211, 7
        %v1213 = vsub.s32 %v1210, %v1212
        %v1214 = vrot.slane %v1206, %v1213
        %v1216 = vunpack.c.l.s4 1983009808
        %v1217 = vunpack.c.0.s8 %v1216
        %v1218 = vlaneseq
        %v1219 = vshrl.u32 %v1218, 7
        %v1220 = vsub.s32 %v1217, %v1219
        %v1221 = vrot.slane %v1207, %v1220
        %v1222 = vcombine.low %v1198, %v1214
        %v1223 = vcombine.high %v1198, %v1214
        %v1225 = vunpack.c.l.s4 1934713408
        %v1226 = vunpack.c.0.s8 %v1225
        %v1227 = vlaneseq
        %v1228 = vshrl.u32 %v1227, 7
        %v1229 = vsub.s32 %v1226, %v1228
        %v1230 = vrot.slane %v1222, %v1229
        %v1232 = vunpack.c.l.s4 1934713408
        %v1233 = vunpack.c.0.s8 %v1232
        %v1234 = vlaneseq
        %v1235 = vshrl.u32 %v1234, 7
        %v1236 = vsub.s32 %v1233, %v1235
        %v1237 = vrot.slane %v1223, %v1236
        %v1238 = vcombine.low %v1205, %v1221
        %v1239 = vcombine.high %v1205, %v1221
        %v1241 = vunpack.c.l.s4 1934713408
        %v1242 = vunpack.c.0.s8 %v1241
        %v1243 = vlaneseq
        %v1244 = vshrl.u32 %v1243, 7
        %v1245 = vsub.s32 %v1242, %v1244
        %v1246 = vrot.slane %v1238, %v1245
        %v1248 = vunpack.c.l.s4 1934713408
        %v1249 = vunpack.c.0.s8 %v1248
        %v1250 = vlaneseq
        %v1251 = vshrl.u32 %v1250, 7
        %v1252 = vsub.s32 %v1249, %v1251
        %v1253 = vrot.slane %v1239, %v1252
        %v1254 = vcombine.high %v1230, 0.0
        %v1255 = vcombine.high %v1237, 0.0
        %v1256 = vcombine.high %v1246, 0.0
        %v1257 = vcombine.high %v1253, 0.0
        %v1258 = vcombine.low %v583, %v1181
        %v1259 = vcombine.high %v583, %v1181
        %v1261 = vunpack.c.l.s4 1983009808
        %v1262 = vunpack.c.0.s8 %v1261
        %v1263 = vlaneseq
        %v1264 = vshrl.u32 %v1263, 7
        %v1265 = vsub.s32 %v1262, %v1264
        %v1266 = vrot.slane %v1258, %v1265
        %v1268 = vunpack.c.l.s4 1983009808
        %v1269 = vunpack.c.0.s8 %v1268
        %v1270 = vlaneseq
        %v1271 = vshrl.u32 %v1270, 7
        %v1272 = vsub.s32 %v1269, %v1271
        %v1273 = vrot.slane %v1259, %v1272
        %v1274 = vcombine.low %v1175, %v1187
        %v1275 = vcombine.high %v1175, %v1187
        %v1277 = vunpack.c.l.s4 1983009808
        %v1278 = vunpack.c.0.s8 %v1277
        %v1279 = vlaneseq
        %v1280 = vshrl.u32 %v1279, 7
        %v1281 = vsub.s32 %v1278, %v1280
        %v1282 = vrot.slane %v1274, %v1281
        %v1284 = vunpack.c.l.s4 1983009808
        %v1285 = vunpack.c.0.s8 %v1284
        %v1286 = vlaneseq
        %v1287 = vshrl.u32 %v1286, 7
        %v1288 = vsub.s32 %v1285, %v1287
        %v1289 = vrot.slane %v1275, %v1288
        %v1290 = vcombine.low %v1266, %v1282
        %v1291 = vcombine.high %v1266, %v1282
        %v1293 = vunpack.c.l.s4 1934713408
        %v1294 = vunpack.c.0.s8 %v1293
        %v1295 = vlaneseq
        %v1296 = vshrl.u32 %v1295, 7
        %v1297 = vsub.s32 %v1294, %v1296
        %v1298 = vrot.slane %v1290, %v1297
        %v1300 = vunpack.c.l.s4 1934713408
        %v1301 = vunpack.c.0.s8 %v1300
        %v1302 = vlaneseq
        %v1303 = vshrl.u32 %v1302, 7
        %v1304 = vsub.s32 %v1301, %v1303
        %v1305 = vrot.slane %v1291, %v1304
        %v1306 = vcombine.low %v1273, %v1289
        %v1307 = vcombine.high %v1273, %v1289
        %v1309 = vunpack.c.l.s4 1934713408
        %v1310 = vunpack.c.0.s8 %v1309
        %v1311 = vlaneseq
        %v1312 = vshrl.u32 %v1311, 7
        %v1313 = vsub.s32 %v1310, %v1312
        %v1314 = vrot.slane %v1306, %v1313
        %v1316 = vunpack.c.l.s4 1934713408
        %v1317 = vunpack.c.0.s8 %v1316
        %v1318 = vlaneseq
        %v1319 = vshrl.u32 %v1318, 7
        %v1320 = vsub.s32 %v1317, %v1319
        %v1321 = vrot.slane %v1307, %v1320
        %v1322 = vcombine.high %v1298, 0.0
        %v1323 = vcombine.high %v1305, 0.0
        %v1324 = vcombine.high %v1314, 0.0
        %v1325 = vcombine.high %v1321, 0.0
        %v1326 = vcombine.low %v1230, %v1237
        %v1328 = vunpack.c.l.s4 1983009808
        %v1329 = vunpack.c.0.s8 %v1328
        %v1330 = vlaneseq
        %v1331 = vshrl.u32 %v1330, 7
        %v1332 = vsub.s32 %v1329, %v1331
        %v1333 = vrot.slane %v1326, %v1332
        %v1334 = vcombine.low %v1254, %v1255
        %v1336 = vunpack.c.l.s4 1983009808
        %v1337 = vunpack.c.0.s8 %v1336
        %v1338 = vlaneseq
        %v1339 = vshrl.u32 %v1338, 7
        %v1340 = vsub.s32 %v1337, %v1339
        %v1341 = vrot.slane %v1334, %v1340
        %v1342 = vcombine.low %v1246, %v1253
        %v1344 = vunpack.c.l.s4 1983009808
        %v1345 = vunpack.c.0.s8 %v1344
        %v1346 = vlaneseq
        %v1347 = vshrl.u32 %v1346, 7
        %v1348 = vsub.s32 %v1345, %v1347
        %v1349 = vrot.slane %v1342, %v1348
        %v1350 = vcombine.low %v1256, %v1257
        %v1352 = vunpack.c.l.s4 1983009808
        %v1353 = vunpack.c.0.s8 %v1352
        %v1354 = vlaneseq
        %v1355 = vshrl.u32 %v1354, 7
        %v1356 = vsub.s32 %v1353, %v1355
        %v1357 = vrot.slane %v1350, %v1356
        %v1358 = vcombine.low %v1333, %v1341
        %v1359 = vcombine.high %v1333, %v1341
        %v1361 = vunpack.c.l.s4 1934713408
        %v1362 = vunpack.c.0.s8 %v1361
        %v1363 = vlaneseq
        %v1364 = vshrl.u32 %v1363, 7
        %v1365 = vsub.s32 %v1362, %v1364
        %v1366 = vrot.slane %v1358, %v1365
        %v1368 = vunpack.c.l.s4 1934713408
        %v1369 = vunpack.c.0.s8 %v1368
        %v1370 = vlaneseq
        %v1371 = vshrl.u32 %v1370, 7
        %v1372 = vsub.s32 %v1369, %v1371
        %v1373 = vrot.slane %v1359, %v1372
        %v1374 = vcombine.low %v1349, %v1357
        %v1375 = vcombine.high %v1349, %v1357
        %v1377 = vunpack.c.l.s4 1934713408
        %v1378 = vunpack.c.0.s8 %v1377
        %v1379 = vlaneseq
        %v1380 = vshrl.u32 %v1379, 7
        %v1381 = vsub.s32 %v1378, %v1380
        %v1382 = vrot.slane %v1374, %v1381
        %v1384 = vunpack.c.l.s4 1934713408
        %v1385 = vunpack.c.0.s8 %v1384
        %v1386 = vlaneseq
        %v1387 = vshrl.u32 %v1386, 7
        %v1388 = vsub.s32 %v1385, %v1387
        %v1389 = vrot.slane %v1375, %v1388
        %v1390 = vcombine.low %v1366, %v1382
        %v1391 = vcombine.high %v1366, %v1382
        %v1392 = vcombine.low %v1373, %v1389
        %v1393 = vcombine.high %v1373, %v1389
        %v1394 = vcombine.low %v1298, %v1305
        %v1396 = vunpack.c.l.s4 1983009808
        %v1397 = vunpack.c.0.s8 %v1396
        %v1398 = vlaneseq
        %v1399 = vshrl.u32 %v1398, 7
        %v1400 = vsub.s32 %v1397, %v1399
        %v1401 = vrot.slane %v1394, %v1400
        %v1402 = vcombine.low %v1322, %v1323
        %v1404 = vunpack.c.l.s4 1983009808
        %v1405 = vunpack.c.0.s8 %v1404
        %v1406 = vlaneseq
        %v1407 = vshrl.u32 %v1406, 7
        %v1408 = vsub.s32 %v1405, %v1407
        %v1409 = vrot.slane %v1402, %v1408
        %v1410 = vcombine.low %v1314, %v1321
        %v1412 = vunpack.c.l.s4 1983009808
        %v1413 = vunpack.c.0.s8 %v1412
        %v1414 = vlaneseq
        %v1415 = vshrl.u32 %v1414, 7
        %v1416 = vsub.s32 %v1413, %v1415
        %v1417 = vrot.slane %v1410, %v1416
        %v1418 = vcombine.low %v1324, %v1325
        %v1420 = vunpack.c.l.s4 1983009808
        %v1421 = vunpack.c.0.s8 %v1420
        %v1422 = vlaneseq
        %v1423 = vshrl.u32 %v1422, 7
        %v1424 = vsub.s32 %v1421, %v1423
        %v1425 = vrot.slane %v1418, %v1424
        %v1426 = vcombine.low %v1401, %v1409
        %v1427 = vcombine.high %v1401, %v1409
        %v1429 = vunpack.c.l.s4 1934713408
        %v1430 = vunpack.c.0.s8 %v1429
        %v1431 = vlaneseq
        %v1432 = vshrl.u32 %v1431, 7
        %v1433 = vsub.s32 %v1430, %v1432
        %v1434 = vrot.slane %v1426, %v1433
        %v1436 = vunpack.c.l.s4 1934713408
        %v1437 = vunpack.c.0.s8 %v1436
        %v1438 = vlaneseq
        %v1439 = vshrl.u32 %v1438, 7
        %v1440 = vsub.s32 %v1437, %v1439
        %v1441 = vrot.slane %v1427, %v1440
        %v1442 = vcombine.low %v1417, %v1425
        %v1443 = vcombine.high %v1417, %v1425
        %v1445 = vunpack.c.l.s4 1934713408
        %v1446 = vunpack.c.0.s8 %v1445
        %v1447 = vlaneseq
        %v1448 = vshrl.u32 %v1447, 7
        %v1449 = vsub.s32 %v1446, %v1448
        %v1450 = vrot.slane %v1442, %v1449
        %v1452 = vunpack.c.l.s4 1934713408
        %v1453 = vunpack.c.0.s8 %v1452
        %v1454 = vlaneseq
        %v1455 = vshrl.u32 %v1454, 7
        %v1456 = vsub.s32 %v1453, %v1455
        %v1457 = vrot.slane %v1443, %v1456
        %v1458 = vcombine.low %v1434, %v1450
        %v1459 = vcombine.high %v1434, %v1450
        %v1460 = vcombine.low %v1441, %v1457
        %v1461 = vcombine.high %v1441, %v1457
        %vm1462 = vcmask 130048
        %v1464 = vsel %vm1462, %v806, 0
        %v1467 = vsel %vm1462, %v874, 0
        %v1470 = vsel %vm1462, %v1098, 0
        %v1473 = vsel %vm1462, %v1166, 0
        %1475 = vmatprep.subr.mxu0 0.0
        %1476 = vmatpush1.xpose.msra.mxu0 %v1470
        %1477 = vmatprep.subr.mxu0 0.0
        %1478 = vmatpush1.xpose.msra.mxu0 %v1473
        %1479 = vmatprep.subr.mxu0 0.0
        %1480 = vmatpush1.xpose.msra.mxu0 0.0
        %1481 = vmatprep.subr.mxu0 0.0
        %1482 = vmatpush1.xpose.msra.mxu0 0.0
        %1483 = vmatprep.subr.mxu0 0.0
        %1484 = vmatpush1.xpose.msra.mxu0 0.0
        %1485 = vmatprep.subr.mxu0 0.0
        %1486 = vmatpush1.xpose.msra.mxu0 0.0
        %1487 = vmatprep.subr.mxu0 0.0
        %1488 = vmatpush1.xpose.msra.mxu0 0.0
        %1489 = vmatprep.subr.mxu0 0.0
        %1490 = vmatpush1.xpose.msra.mxu0 0.0
        %1491 = vmatprep.subr.mxu0 0.0
        %1492 = vmatpush1.xpose.msra.mxu0 0.0
        %1493 = vmatprep.subr.mxu0 0.0
        %1494 = vmatpush1.xpose.msra.mxu0 0.0
        %1495 = vmatprep.subr.mxu0 0.0
        %1496 = vmatpush1.xpose.msra.mxu0 0.0
        %1497 = vmatprep.subr.mxu0 0.0
        %1498 = vmatpush1.xpose.msra.mxu0 0.0
        %1499 = vmatprep.subr.mxu0 0.0
        %1500 = vmatpush1.xpose.msra.mxu0 0.0
        %1501 = vmatprep.subr.mxu0 0.0
        %1502 = vmatpush1.xpose.msra.mxu0 0.0
        %1503 = vmatprep.subr.mxu0 0.0
        %1504 = vmatpush1.xpose.msra.mxu0 0.0
        %1505 = vmatprep.subr.mxu0 0.0
        %1506 = vmatpush1.xpose.msra.mxu0 0.0
        %1507 = vmatprep.subr.mxu0 0.0
        %1508 = vmatpush1.xpose.msra.mxu0 0.0
        %1509 = vmatprep.subr.mxu0 0.0
        %1510 = vmatpush1.xpose.msra.mxu0 0.0
        %1511 = vmatprep.subr.mxu0 0.0
        %1512 = vmatpush1.xpose.msra.mxu0 0.0
        %1513 = vmatprep.subr.mxu0 0.0
        %1514 = vmatpush1.xpose.msra.mxu0 0.0
        %1515 = vmatprep.subr.mxu0 0.0
        %1516 = vmatpush1.xpose.msra.mxu0 0.0
        %1517 = vmatprep.subr.mxu0 0.0
        %1518 = vmatpush1.xpose.msra.mxu0 0.0
        %1519 = vmatprep.subr.mxu0 0.0
        %1520 = vmatpush1.xpose.msra.mxu0 0.0
        %1521 = vmatprep.subr.mxu0 0.0
        %1522 = vmatpush1.xpose.msra.mxu0 0.0
        %1523 = vmatprep.subr.mxu0 0.0
        %1524 = vmatpush1.xpose.msra.mxu0 0.0
        %1525 = vmatprep.subr.mxu0 0.0
        %1526 = vmatpush1.xpose.msra.mxu0 0.0
        %1527 = vmatprep.subr.mxu0 0.0
        %1528 = vmatpush1.xpose.msra.mxu0 0.0
        %1529 = vmatprep.subr.mxu0 0.0
        %1530 = vmatpush1.xpose.msra.mxu0 0.0
        %1531 = vmatprep.subr.mxu0 0.0
        %1532 = vmatpush1.xpose.msra.mxu0 0.0
        %1533 = vmatprep.subr.mxu0 0.0
        %1534 = vmatpush1.xpose.msra.mxu0 0.0
        %1535 = vmatprep.subr.mxu0 0.0
        %1536 = vmatpush1.xpose.msra.mxu0 0.0
        %1537 = vmatprep.subr.mxu0 0.0
        %1538 = vmatpush1.xpose.msra.mxu0 0.0
        %1539 = vmatprep.mubr.f32.mxu0 0.0
        %1540 = vmatmul.mubr.f32.gmra.mrb[0].mxu0 %v1464
        %v1541 = vpop.f32.mrb[0].mxu0
        %v1542 = vadd.f32 0.0, %v1541
        %v1543 = vpop.f32.mrb[0].mxu0
        %1544 = vmatprep.mubr.f32.mxu0 0.0
        %1545 = vmatmul.mubr.f32.gmra.mrb[0].mxu0 %v1467
        %v1546 = vpop.f32.mrb[0].mxu0
        %v1547 = vadd.f32 0.0, %v1546
        %v1548 = vpop.f32.mrb[0].mxu0
        %1549 = vdwg.mxu0
        %v1551 = vsel %vm1462, %v807, 0
        %v1554 = vsel %vm1462, %v875, 0
        %v1557 = vsel %vm1462, %v1099, 0
        %v1560 = vsel %vm1462, %v1167, 0
        %1562 = vmatprep.subr.mxu0 0.0
        %1563 = vmatpush1.xpose.msra.mxu0 %v1557
        %1564 = vmatprep.subr.mxu0 0.0
        %1565 = vmatpush1.xpose.msra.mxu0 %v1560
        %1566 = vmatprep.subr.mxu0 0.0
        %1567 = vmatpush1.xpose.msra.mxu0 0.0
        %1568 = vmatprep.subr.mxu0 0.0
        %1569 = vmatpush1.xpose.msra.mxu0 0.0
        %1570 = vmatprep.subr.mxu0 0.0
        %1571 = vmatpush1.xpose.msra.mxu0 0.0
        %1572 = vmatprep.subr.mxu0 0.0
        %1573 = vmatpush1.xpose.msra.mxu0 0.0
        %1574 = vmatprep.subr.mxu0 0.0
        %1575 = vmatpush1.xpose.msra.mxu0 0.0
        %1576 = vmatprep.subr.mxu0 0.0
        %1577 = vmatpush1.xpose.msra.mxu0 0.0
        %1578 = vmatprep.subr.mxu0 0.0
        %1579 = vmatpush1.xpose.msra.mxu0 0.0
        %1580 = vmatprep.subr.mxu0 0.0
        %1581 = vmatpush1.xpose.msra.mxu0 0.0
        %1582 = vmatprep.subr.mxu0 0.0
        %1583 = vmatpush1.xpose.msra.mxu0 0.0
        %1584 = vmatprep.subr.mxu0 0.0
        %1585 = vmatpush1.xpose.msra.mxu0 0.0
        %1586 = vmatprep.subr.mxu0 0.0
        %1587 = vmatpush1.xpose.msra.mxu0 0.0
        %1588 = vmatprep.subr.mxu0 0.0
        %1589 = vmatpush1.xpose.msra.mxu0 0.0
        %1590 = vmatprep.subr.mxu0 0.0
        %1591 = vmatpush1.xpose.msra.mxu0 0.0
        %1592 = vmatprep.subr.mxu0 0.0
        %1593 = vmatpush1.xpose.msra.mxu0 0.0
        %1594 = vmatprep.subr.mxu0 0.0
        %1595 = vmatpush1.xpose.msra.mxu0 0.0
        %1596 = vmatprep.subr.mxu0 0.0
        %1597 = vmatpush1.xpose.msra.mxu0 0.0
        %1598 = vmatprep.subr.mxu0 0.0
        %1599 = vmatpush1.xpose.msra.mxu0 0.0
        %1600 = vmatprep.subr.mxu0 0.0
        %1601 = vmatpush1.xpose.msra.mxu0 0.0
        %1602 = vmatprep.subr.mxu0 0.0
        %1603 = vmatpush1.xpose.msra.mxu0 0.0
        %1604 = vmatprep.subr.mxu0 0.0
        %1605 = vmatpush1.xpose.msra.mxu0 0.0
        %1606 = vmatprep.subr.mxu0 0.0
        %1607 = vmatpush1.xpose.msra.mxu0 0.0
        %1608 = vmatprep.subr.mxu0 0.0
        %1609 = vmatpush1.xpose.msra.mxu0 0.0
        %1610 = vmatprep.subr.mxu0 0.0
        %1611 = vmatpush1.xpose.msra.mxu0 0.0
        %1612 = vmatprep.subr.mxu0 0.0
        %1613 = vmatpush1.xpose.msra.mxu0 0.0
        %1614 = vmatprep.subr.mxu0 0.0
        %1615 = vmatpush1.xpose.msra.mxu0 0.0
        %1616 = vmatprep.subr.mxu0 0.0
        %1617 = vmatpush1.xpose.msra.mxu0 0.0
        %1618 = vmatprep.subr.mxu0 0.0
        %1619 = vmatpush1.xpose.msra.mxu0 0.0
        %1620 = vmatprep.subr.mxu0 0.0
        %1621 = vmatpush1.xpose.msra.mxu0 0.0
        %1622 = vmatprep.subr.mxu0 0.0
        %1623 = vmatpush1.xpose.msra.mxu0 0.0
        %1624 = vmatprep.subr.mxu0 0.0
        %1625 = vmatpush1.xpose.msra.mxu0 0.0
        %1626 = vmatprep.mubr.f32.mxu0 0.0
        %1627 = vmatmul.mubr.f32.gmra.mrb[0].mxu0 %v1551
        %v1628 = vpop.f32.mrb[0].mxu0
        %v1629 = vadd.f32 0.0, %v1628
        %v1630 = vpop.f32.mrb[0].mxu0
        %1631 = vmatprep.mubr.f32.mxu0 0.0
        %1632 = vmatmul.mubr.f32.gmra.mrb[0].mxu0 %v1554
        %v1633 = vpop.f32.mrb[0].mxu0
        %v1634 = vadd.f32 0.0, %v1633
        %v1635 = vpop.f32.mrb[0].mxu0
        %1636 = vdwg.mxu0
        %v1638 = vsel %vm1462, %v808, 0
        %v1641 = vsel %vm1462, %v876, 0
        %v1644 = vsel %vm1462, %v1100, 0
        %v1647 = vsel %vm1462, %v1168, 0
        %1649 = vmatprep.subr.mxu0 0.0
        %1650 = vmatpush1.xpose.msra.mxu0 %v1644
        %1651 = vmatprep.subr.mxu0 0.0
        %1652 = vmatpush1.xpose.msra.mxu0 %v1647
        %1653 = vmatprep.subr.mxu0 0.0
        %1654 = vmatpush1.xpose.msra.mxu0 0.0
        %1655 = vmatprep.subr.mxu0 0.0
        %1656 = vmatpush1.xpose.msra.mxu0 0.0
        %1657 = vmatprep.subr.mxu0 0.0
        %1658 = vmatpush1.xpose.msra.mxu0 0.0
        %1659 = vmatprep.subr.mxu0 0.0
        %1660 = vmatpush1.xpose.msra.mxu0 0.0
        %1661 = vmatprep.subr.mxu0 0.0
        %1662 = vmatpush1.xpose.msra.mxu0 0.0
        %1663 = vmatprep.subr.mxu0 0.0
        %1664 = vmatpush1.xpose.msra.mxu0 0.0
        %1665 = vmatprep.subr.mxu0 0.0
        %1666 = vmatpush1.xpose.msra.mxu0 0.0
        %1667 = vmatprep.subr.mxu0 0.0
        %1668 = vmatpush1.xpose.msra.mxu0 0.0
        %1669 = vmatprep.subr.mxu0 0.0
        %1670 = vmatpush1.xpose.msra.mxu0 0.0
        %1671 = vmatprep.subr.mxu0 0.0
        %1672 = vmatpush1.xpose.msra.mxu0 0.0
        %1673 = vmatprep.subr.mxu0 0.0
        %1674 = vmatpush1.xpose.msra.mxu0 0.0
        %1675 = vmatprep.subr.mxu0 0.0
        %1676 = vmatpush1.xpose.msra.mxu0 0.0
        %1677 = vmatprep.subr.mxu0 0.0
        %1678 = vmatpush1.xpose.msra.mxu0 0.0
        %1679 = vmatprep.subr.mxu0 0.0
        %1680 = vmatpush1.xpose.msra.mxu0 0.0
        %1681 = vmatprep.subr.mxu0 0.0
        %1682 = vmatpush1.xpose.msra.mxu0 0.0
        %1683 = vmatprep.subr.mxu0 0.0
        %1684 = vmatpush1.xpose.msra.mxu0 0.0
        %1685 = vmatprep.subr.mxu0 0.0
        %1686 = vmatpush1.xpose.msra.mxu0 0.0
        %1687 = vmatprep.subr.mxu0 0.0
        %1688 = vmatpush1.xpose.msra.mxu0 0.0
        %1689 = vmatprep.subr.mxu0 0.0
        %1690 = vmatpush1.xpose.msra.mxu0 0.0
        %1691 = vmatprep.subr.mxu0 0.0
        %1692 = vmatpush1.xpose.msra.mxu0 0.0
        %1693 = vmatprep.subr.mxu0 0.0
        %1694 = vmatpush1.xpose.msra.mxu0 0.0
        %1695 = vmatprep.subr.mxu0 0.0
        %1696 = vmatpush1.xpose.msra.mxu0 0.0
        %1697 = vmatprep.subr.mxu0 0.0
        %1698 = vmatpush1.xpose.msra.mxu0 0.0
        %1699 = vmatprep.subr.mxu0 0.0
        %1700 = vmatpush1.xpose.msra.mxu0 0.0
        %1701 = vmatprep.subr.mxu0 0.0
        %1702 = vmatpush1.xpose.msra.mxu0 0.0
        %1703 = vmatprep.subr.mxu0 0.0
        %1704 = vmatpush1.xpose.msra.mxu0 0.0
        %1705 = vmatprep.subr.mxu0 0.0
        %1706 = vmatpush1.xpose.msra.mxu0 0.0
        %1707 = vmatprep.subr.mxu0 0.0
        %1708 = vmatpush1.xpose.msra.mxu0 0.0
        %1709 = vmatprep.subr.mxu0 0.0
        %1710 = vmatpush1.xpose.msra.mxu0 0.0
        %1711 = vmatprep.subr.mxu0 0.0
        %1712 = vmatpush1.xpose.msra.mxu0 0.0
        %1713 = vmatprep.mubr.f32.mxu0 0.0
        %1714 = vmatmul.mubr.f32.gmra.mrb[0].mxu0 %v1638
        %v1715 = vpop.f32.mrb[0].mxu0
        %v1716 = vadd.f32 0.0, %v1715
        %v1717 = vpop.f32.mrb[0].mxu0
        %1718 = vmatprep.mubr.f32.mxu0 0.0
        %1719 = vmatmul.mubr.f32.gmra.mrb[0].mxu0 %v1641
        %v1720 = vpop.f32.mrb[0].mxu0
        %v1721 = vadd.f32 0.0, %v1720
        %v1722 = vpop.f32.mrb[0].mxu0
        %1723 = vdwg.mxu0
        %v1725 = vsel %vm1462, %v809, 0
        %v1728 = vsel %vm1462, %v877, 0
        %v1731 = vsel %vm1462, %v1101, 0
        %v1734 = vsel %vm1462, %v1169, 0
        %1736 = vmatprep.subr.mxu0 0.0
        %1737 = vmatpush1.xpose.msra.mxu0 %v1731
        %1738 = vmatprep.subr.mxu0 0.0
        %1739 = vmatpush1.xpose.msra.mxu0 %v1734
        %1740 = vmatprep.subr.mxu0 0.0
        %1741 = vmatpush1.xpose.msra.mxu0 0.0
        %1742 = vmatprep.subr.mxu0 0.0
        %1743 = vmatpush1.xpose.msra.mxu0 0.0
        %1744 = vmatprep.subr.mxu0 0.0
        %1745 = vmatpush1.xpose.msra.mxu0 0.0
        %1746 = vmatprep.subr.mxu0 0.0
        %1747 = vmatpush1.xpose.msra.mxu0 0.0
        %1748 = vmatprep.subr.mxu0 0.0
        %1749 = vmatpush1.xpose.msra.mxu0 0.0
        %1750 = vmatprep.subr.mxu0 0.0
        %1751 = vmatpush1.xpose.msra.mxu0 0.0
        %1752 = vmatprep.subr.mxu0 0.0
        %1753 = vmatpush1.xpose.msra.mxu0 0.0
        %1754 = vmatprep.subr.mxu0 0.0
        %1755 = vmatpush1.xpose.msra.mxu0 0.0
        %1756 = vmatprep.subr.mxu0 0.0
        %1757 = vmatpush1.xpose.msra.mxu0 0.0
        %1758 = vmatprep.subr.mxu0 0.0
        %1759 = vmatpush1.xpose.msra.mxu0 0.0
        %1760 = vmatprep.subr.mxu0 0.0
        %1761 = vmatpush1.xpose.msra.mxu0 0.0
        %1762 = vmatprep.subr.mxu0 0.0
        %1763 = vmatpush1.xpose.msra.mxu0 0.0
        %1764 = vmatprep.subr.mxu0 0.0
        %1765 = vmatpush1.xpose.msra.mxu0 0.0
        %1766 = vmatprep.subr.mxu0 0.0
        %1767 = vmatpush1.xpose.msra.mxu0 0.0
        %1768 = vmatprep.subr.mxu0 0.0
        %1769 = vmatpush1.xpose.msra.mxu0 0.0
        %1770 = vmatprep.subr.mxu0 0.0
        %1771 = vmatpush1.xpose.msra.mxu0 0.0
        %1772 = vmatprep.subr.mxu0 0.0
        %1773 = vmatpush1.xpose.msra.mxu0 0.0
        %1774 = vmatprep.subr.mxu0 0.0
        %1775 = vmatpush1.xpose.msra.mxu0 0.0
        %1776 = vmatprep.subr.mxu0 0.0
        %1777 = vmatpush1.xpose.msra.mxu0 0.0
        %1778 = vmatprep.subr.mxu0 0.0
        %1779 = vmatpush1.xpose.msra.mxu0 0.0
        %1780 = vmatprep.subr.mxu0 0.0
        %1781 = vmatpush1.xpose.msra.mxu0 0.0
        %1782 = vmatprep.subr.mxu0 0.0
        %1783 = vmatpush1.xpose.msra.mxu0 0.0
        %1784 = vmatprep.subr.mxu0 0.0
        %1785 = vmatpush1.xpose.msra.mxu0 0.0
        %1786 = vmatprep.subr.mxu0 0.0
        %1787 = vmatpush1.xpose.msra.mxu0 0.0
        %1788 = vmatprep.subr.mxu0 0.0
        %1789 = vmatpush1.xpose.msra.mxu0 0.0
        %1790 = vmatprep.subr.mxu0 0.0
        %1791 = vmatpush1.xpose.msra.mxu0 0.0
        %1792 = vmatprep.subr.mxu0 0.0
        %1793 = vmatpush1.xpose.msra.mxu0 0.0
        %1794 = vmatprep.subr.mxu0 0.0
        %1795 = vmatpush1.xpose.msra.mxu0 0.0
        %1796 = vmatprep.subr.mxu0 0.0
        %1797 = vmatpush1.xpose.msra.mxu0 0.0
        %1798 = vmatprep.subr.mxu0 0.0
        %1799 = vmatpush1.xpose.msra.mxu0 0.0
        %1800 = vmatprep.mubr.f32.mxu0 0.0
        %1801 = vmatmul.mubr.f32.gmra.mrb[0].mxu0 %v1725
        %v1802 = vpop.f32.mrb[0].mxu0
        %v1803 = vadd.f32 0.0, %v1802
        %v1804 = vpop.f32.mrb[0].mxu0
        %1805 = vmatprep.mubr.f32.mxu0 0.0
        %1806 = vmatmul.mubr.f32.gmra.mrb[0].mxu0 %v1728
        %v1807 = vpop.f32.mrb[0].mxu0
        %v1808 = vadd.f32 0.0, %v1807
        %v1809 = vpop.f32.mrb[0].mxu0
        %1810 = vdwg.mxu0
        %v1811 = vsel %vm1462, %v1542, -inf
        %1812 = vmax.xlane.f32.xlu0 %v1811
        %v1813 = vpop.xlane.xlu0 %1812
        %v1814 = vsel %vm1462, %v1547, -inf
        %1815 = vmax.xlane.f32.xlu0 %v1814
        %v1816 = vpop.xlane.xlu0 %1815
        %v1817 = vsel %vm1462, %v1629, -inf
        %1818 = vmax.xlane.f32.xlu0 %v1817
        %v1819 = vpop.xlane.xlu0 %1818
        %v1820 = vsel %vm1462, %v1634, -inf
        %1821 = vmax.xlane.f32.xlu0 %v1820
        %v1822 = vpop.xlane.xlu0 %1821
        %v1823 = vsel %vm1462, %v1716, -inf
        %1824 = vmax.xlane.f32.xlu0 %v1823
        %v1825 = vpop.xlane.xlu0 %1824
        %v1826 = vsel %vm1462, %v1721, -inf
        %1827 = vmax.xlane.f32.xlu0 %v1826
        %v1828 = vpop.xlane.xlu0 %1827
        %v1829 = vsel %vm1462, %v1803, -inf
        %1830 = vmax.xlane.f32.xlu0 %v1829
        %v1831 = vpop.xlane.xlu0 %1830
        %v1832 = vsel %vm1462, %v1808, -inf
        %1833 = vmax.xlane.f32.xlu0 %v1832
        %v1834 = vpop.xlane.xlu0 %1833
        %v1835 = vsub.f32 %v1542, %v1813
        %v1836 = vsub.f32 %v1547, %v1816
        %v1837 = vsub.f32 %v1629, %v1819
        %v1838 = vsub.f32 %v1634, %v1822
        %v1839 = vsub.f32 %v1716, %v1825
        %v1840 = vsub.f32 %v1721, %v1828
        %v1841 = vsub.f32 %v1803, %v1831
        %v1842 = vsub.f32 %v1808, %v1834
        %v1843 = vmul.f32 %v1835, 1.442695
        %v1844 = vpow.pop %v1843
        %v1845 = vmul.f32 %v1836, 1.442695
        %v1846 = vpow.pop %v1845
        %v1847 = vmul.f32 %v1837, 1.442695
        %v1848 = vpow.pop %v1847
        %v1849 = vmul.f32 %v1838, 1.442695
        %v1850 = vpow.pop %v1849
        %v1851 = vmul.f32 %v1839, 1.442695
        %v1852 = vpow.pop %v1851
        %v1853 = vmul.f32 %v1840, 1.442695
        %v1854 = vpow.pop %v1853
        %v1855 = vmul.f32 %v1841, 1.442695
        %v1856 = vpow.pop %v1855
        %v1857 = vmul.f32 %v1842, 1.442695
        %v1858 = vpow.pop %v1857
        %v1859 = vsel %vm1462, %v1844, 0.0
        %1860 = vadd.xlane.f32.xlu0 %v1859
        %v1861 = vpop.xlane.xlu0 %1860
        %v1862 = vsel %vm1462, %v1846, 0.0
        %1863 = vadd.xlane.f32.xlu0 %v1862
        %v1864 = vpop.xlane.xlu0 %1863
        %v1865 = vsel %vm1462, %v1848, 0.0
        %1866 = vadd.xlane.f32.xlu0 %v1865
        %v1867 = vpop.xlane.xlu0 %1866
        %v1868 = vsel %vm1462, %v1850, 0.0
        %1869 = vadd.xlane.f32.xlu0 %v1868
        %v1870 = vpop.xlane.xlu0 %1869
        %v1871 = vsel %vm1462, %v1852, 0.0
        %1872 = vadd.xlane.f32.xlu0 %v1871
        %v1873 = vpop.xlane.xlu0 %1872
        %v1874 = vsel %vm1462, %v1854, 0.0
        %1875 = vadd.xlane.f32.xlu0 %v1874
        %v1876 = vpop.xlane.xlu0 %1875
        %v1877 = vsel %vm1462, %v1856, 0.0
        %1878 = vadd.xlane.f32.xlu0 %v1877
        %v1879 = vpop.xlane.xlu0 %1878
        %v1880 = vsel %vm1462, %v1858, 0.0
        %1881 = vadd.xlane.f32.xlu0 %v1880
        %v1882 = vpop.xlane.xlu0 %1881
        %v1883 = vrcp.pop %v1861
        %v1884 = vrcp.pop %v1864
        %v1885 = vrcp.pop %v1867
        %v1886 = vrcp.pop %v1870
        %v1887 = vrcp.pop %v1873
        %v1888 = vrcp.pop %v1876
        %v1889 = vrcp.pop %v1879
        %v1890 = vrcp.pop %v1882
        %v1891 = vmul.f32 %v1844, %v1883
        %v1892 = vmul.f32 %v1846, %v1884
        %v1893 = vmul.f32 %v1848, %v1885
        %v1894 = vmul.f32 %v1850, %v1886
        %v1895 = vmul.f32 %v1852, %v1887
        %v1896 = vmul.f32 %v1854, %v1888
        %v1897 = vmul.f32 %v1856, %v1889
        %v1898 = vmul.f32 %v1858, %v1890
        %v1900 = vsel %vm1462, %v1891, 0
        %v1903 = vsel %vm1462, %v1892, 0
        %1905 = vmatprep.subr.mxu0 0.0
        %1906 = vmatpush1.msra.mxu0 %v1390
        %1907 = vmatprep.subr.mxu0 0.0
        %1908 = vmatpush1.msra.mxu0 %v1458
        %1909 = vmatprep.subr.mxu0 0.0
        %1910 = vmatpush1.msra.mxu0 0.0
        %1911 = vmatprep.subr.mxu0 0.0
        %1912 = vmatpush1.msra.mxu0 0.0
        %1913 = vmatprep.subr.mxu0 0.0
        %1914 = vmatpush1.msra.mxu0 0.0
        %1915 = vmatprep.subr.mxu0 0.0
        %1916 = vmatpush1.msra.mxu0 0.0
        %1917 = vmatprep.subr.mxu0 0.0
        %1918 = vmatpush1.msra.mxu0 0.0
        %1919 = vmatprep.subr.mxu0 0.0
        %1920 = vmatpush1.msra.mxu0 0.0
        %1921 = vmatprep.subr.mxu0 0.0
        %1922 = vmatpush1.msra.mxu0 0.0
        %1923 = vmatprep.subr.mxu0 0.0
        %1924 = vmatpush1.msra.mxu0 0.0
        %1925 = vmatprep.subr.mxu0 0.0
        %1926 = vmatpush1.msra.mxu0 0.0
        %1927 = vmatprep.subr.mxu0 0.0
        %1928 = vmatpush1.msra.mxu0 0.0
        %1929 = vmatprep.subr.mxu0 0.0
        %1930 = vmatpush1.msra.mxu0 0.0
        %1931 = vmatprep.subr.mxu0 0.0
        %1932 = vmatpush1.msra.mxu0 0.0
        %1933 = vmatprep.subr.mxu0 0.0
        %1934 = vmatpush1.msra.mxu0 0.0
        %1935 = vmatprep.subr.mxu0 0.0
        %1936 = vmatpush1.msra.mxu0 0.0
        %1937 = vmatprep.subr.mxu0 0.0
        %1938 = vmatpush1.msra.mxu0 0.0
        %1939 = vmatprep.subr.mxu0 0.0
        %1940 = vmatpush1.msra.mxu0 0.0
        %1941 = vmatprep.subr.mxu0 0.0
        %1942 = vmatpush1.msra.mxu0 0.0
        %1943 = vmatprep.subr.mxu0 0.0
        %1944 = vmatpush1.msra.mxu0 0.0
        %1945 = vmatprep.subr.mxu0 0.0
        %1946 = vmatpush1.msra.mxu0 0.0
        %1947 = vmatprep.subr.mxu0 0.0
        %1948 = vmatpush1.msra.mxu0 0.0
        %1949 = vmatprep.subr.mxu0 0.0
        %1950 = vmatpush1.msra.mxu0 0.0
        %1951 = vmatprep.subr.mxu0 0.0
        %1952 = vmatpush1.msra.mxu0 0.0
        %1953 = vmatprep.subr.mxu0 0.0
        %1954 = vmatpush1.msra.mxu0 0.0
        %1955 = vmatprep.subr.mxu0 0.0
        %1956 = vmatpush1.msra.mxu0 0.0
        %1957 = vmatprep.subr.mxu0 0.0
        %1958 = vmatpush1.msra.mxu0 0.0
        %1959 = vmatprep.subr.mxu0 0.0
        %1960 = vmatpush1.msra.mxu0 0.0
        %1961 = vmatprep.subr.mxu0 0.0
        %1962 = vmatpush1.msra.mxu0 0.0
        %1963 = vmatprep.subr.mxu0 0.0
        %1964 = vmatpush1.msra.mxu0 0.0
        %1965 = vmatprep.subr.mxu0 0.0
        %1966 = vmatpush1.msra.mxu0 0.0
        %1967 = vmatprep.subr.mxu0 0.0
        %1968 = vmatpush1.msra.mxu0 0.0
        %1969 = vmatprep.mubr.f32.mxu0 0.0
        %1970 = vmatmul.mubr.f32.gmra.mrb[0].mxu0 %v1900
        %v1971 = vpop.f32.mrb[0].mxu0
        %v1972 = vadd.f32 0.0, %v1971
        %v1973 = vpop.f32.mrb[0].mxu0
        %1974 = vmatprep.mubr.f32.mxu0 0.0
        %1975 = vmatmul.mubr.f32.gmra.mrb[0].mxu0 %v1903
        %v1976 = vpop.f32.mrb[0].mxu0
        %v1977 = vadd.f32 0.0, %v1976
        %v1978 = vpop.f32.mrb[0].mxu0
        %1979 = vdwg.mxu0
        %v1981 = vsel %vm1462, %v1893, 0
        %v1984 = vsel %vm1462, %v1894, 0
        %1986 = vmatprep.subr.mxu0 0.0
        %1987 = vmatpush1.msra.mxu0 %v1391
        %1988 = vmatprep.subr.mxu0 0.0
        %1989 = vmatpush1.msra.mxu0 %v1459
        %1990 = vmatprep.subr.mxu0 0.0
        %1991 = vmatpush1.msra.mxu0 0.0
        %1992 = vmatprep.subr.mxu0 0.0
        %1993 = vmatpush1.msra.mxu0 0.0
        %1994 = vmatprep.subr.mxu0 0.0
        %1995 = vmatpush1.msra.mxu0 0.0
        %1996 = vmatprep.subr.mxu0 0.0
        %1997 = vmatpush1.msra.mxu0 0.0
        %1998 = vmatprep.subr.mxu0 0.0
        %1999 = vmatpush1.msra.mxu0 0.0
        %2000 = vmatprep.subr.mxu0 0.0
        %2001 = vmatpush1.msra.mxu0 0.0
        %2002 = vmatprep.subr.mxu0 0.0
        %2003 = vmatpush1.msra.mxu0 0.0
        %2004 = vmatprep.subr.mxu0 0.0
        %2005 = vmatpush1.msra.mxu0 0.0
        %2006 = vmatprep.subr.mxu0 0.0
        %2007 = vmatpush1.msra.mxu0 0.0
        %2008 = vmatprep.subr.mxu0 0.0
        %2009 = vmatpush1.msra.mxu0 0.0
        %2010 = vmatprep.subr.mxu0 0.0
        %2011 = vmatpush1.msra.mxu0 0.0
        %2012 = vmatprep.subr.mxu0 0.0
        %2013 = vmatpush1.msra.mxu0 0.0
        %2014 = vmatprep.subr.mxu0 0.0
        %2015 = vmatpush1.msra.mxu0 0.0
        %2016 = vmatprep.subr.mxu0 0.0
        %2017 = vmatpush1.msra.mxu0 0.0
        %2018 = vmatprep.subr.mxu0 0.0
        %2019 = vmatpush1.msra.mxu0 0.0
        %2020 = vmatprep.subr.mxu0 0.0
        %2021 = vmatpush1.msra.mxu0 0.0
        %2022 = vmatprep.subr.mxu0 0.0
        %2023 = vmatpush1.msra.mxu0 0.0
        %2024 = vmatprep.subr.mxu0 0.0
        %2025 = vmatpush1.msra.mxu0 0.0
        %2026 = vmatprep.subr.mxu0 0.0
        %2027 = vmatpush1.msra.mxu0 0.0
        %2028 = vmatprep.subr.mxu0 0.0
        %2029 = vmatpush1.msra.mxu0 0.0
        %2030 = vmatprep.subr.mxu0 0.0
        %2031 = vmatpush1.msra.mxu0 0.0
        %2032 = vmatprep.subr.mxu0 0.0
        %2033 = vmatpush1.msra.mxu0 0.0
        %2034 = vmatprep.subr.mxu0 0.0
        %2035 = vmatpush1.msra.mxu0 0.0
        %2036 = vmatprep.subr.mxu0 0.0
        %2037 = vmatpush1.msra.mxu0 0.0
        %2038 = vmatprep.subr.mxu0 0.0
        %2039 = vmatpush1.msra.mxu0 0.0
        %2040 = vmatprep.subr.mxu0 0.0
        %2041 = vmatpush1.msra.mxu0 0.0
        %2042 = vmatprep.subr.mxu0 0.0
        %2043 = vmatpush1.msra.mxu0 0.0
        %2044 = vmatprep.subr.mxu0 0.0
        %2045 = vmatpush1.msra.mxu0 0.0
        %2046 = vmatprep.subr.mxu0 0.0
        %2047 = vmatpush1.msra.mxu0 0.0
        %2048 = vmatprep.subr.mxu0 0.0
        %2049 = vmatpush1.msra.mxu0 0.0
        %2050 = vmatprep.mubr.f32.mxu0 0.0
        %2051 = vmatmul.mubr.f32.gmra.mrb[0].mxu0 %v1981
        %v2052 = vpop.f32.mrb[0].mxu0
        %v2053 = vadd.f32 0.0, %v2052
        %v2054 = vpop.f32.mrb[0].mxu0
        %2055 = vmatprep.mubr.f32.mxu0 0.0
        %2056 = vmatmul.mubr.f32.gmra.mrb[0].mxu0 %v1984
        %v2057 = vpop.f32.mrb[0].mxu0
        %v2058 = vadd.f32 0.0, %v2057
        %v2059 = vpop.f32.mrb[0].mxu0
        %2060 = vdwg.mxu0
        %v2062 = vsel %vm1462, %v1895, 0
        %v2065 = vsel %vm1462, %v1896, 0
        %2067 = vmatprep.subr.mxu0 0.0
        %2068 = vmatpush1.msra.mxu0 %v1392
        %2069 = vmatprep.subr.mxu0 0.0
        %2070 = vmatpush1.msra.mxu0 %v1460
        %2071 = vmatprep.subr.mxu0 0.0
        %2072 = vmatpush1.msra.mxu0 0.0
        %2073 = vmatprep.subr.mxu0 0.0
        %2074 = vmatpush1.msra.mxu0 0.0
        %2075 = vmatprep.subr.mxu0 0.0
        %2076 = vmatpush1.msra.mxu0 0.0
        %2077 = vmatprep.subr.mxu0 0.0
        %2078 = vmatpush1.msra.mxu0 0.0
        %2079 = vmatprep.subr.mxu0 0.0
        %2080 = vmatpush1.msra.mxu0 0.0
        %2081 = vmatprep.subr.mxu0 0.0
        %2082 = vmatpush1.msra.mxu0 0.0
        %2083 = vmatprep.subr.mxu0 0.0
        %2084 = vmatpush1.msra.mxu0 0.0
        %2085 = vmatprep.subr.mxu0 0.0
        %2086 = vmatpush1.msra.mxu0 0.0
        %2087 = vmatprep.subr.mxu0 0.0
        %2088 = vmatpush1.msra.mxu0 0.0
        %2089 = vmatprep.subr.mxu0 0.0
        %2090 = vmatpush1.msra.mxu0 0.0
        %2091 = vmatprep.subr.mxu0 0.0
        %2092 = vmatpush1.msra.mxu0 0.0
        %2093 = vmatprep.subr.mxu0 0.0
        %2094 = vmatpush1.msra.mxu0 0.0
        %2095 = vmatprep.subr.mxu0 0.0
        %2096 = vmatpush1.msra.mxu0 0.0
        %2097 = vmatprep.subr.mxu0 0.0
        %2098 = vmatpush1.msra.mxu0 0.0
        %2099 = vmatprep.subr.mxu0 0.0
        %2100 = vmatpush1.msra.mxu0 0.0
        %2101 = vmatprep.subr.mxu0 0.0
        %2102 = vmatpush1.msra.mxu0 0.0
        %2103 = vmatprep.subr.mxu0 0.0
        %2104 = vmatpush1.msra.mxu0 0.0
        %2105 = vmatprep.subr.mxu0 0.0
        %2106 = vmatpush1.msra.mxu0 0.0
        %2107 = vmatprep.subr.mxu0 0.0
        %2108 = vmatpush1.msra.mxu0 0.0
        %2109 = vmatprep.subr.mxu0 0.0
        %2110 = vmatpush1.msra.mxu0 0.0
        %2111 = vmatprep.subr.mxu0 0.0
        %2112 = vmatpush1.msra.mxu0 0.0
        %2113 = vmatprep.subr.mxu0 0.0
        %2114 = vmatpush1.msra.mxu0 0.0
        %2115 = vmatprep.subr.mxu0 0.0
        %2116 = vmatpush1.msra.mxu0 0.0
        %2117 = vmatprep.subr.mxu0 0.0
        %2118 = vmatpush1.msra.mxu0 0.0
        %2119 = vmatprep.subr.mxu0 0.0
        %2120 = vmatpush1.msra.mxu0 0.0
        %2121 = vmatprep.subr.mxu0 0.0
        %2122 = vmatpush1.msra.mxu0 0.0
        %2123 = vmatprep.subr.mxu0 0.0
        %2124 = vmatpush1.msra.mxu0 0.0
        %2125 = vmatprep.subr.mxu0 0.0
        %2126 = vmatpush1.msra.mxu0 0.0
        %2127 = vmatprep.subr.mxu0 0.0
        %2128 = vmatpush1.msra.mxu0 0.0
        %2129 = vmatprep.subr.mxu0 0.0
        %2130 = vmatpush1.msra.mxu0 0.0
        %2131 = vmatprep.mubr.f32.mxu0 0.0
        %2132 = vmatmul.mubr.f32.gmra.mrb[0].mxu0 %v2062
        %v2133 = vpop.f32.mrb[0].mxu0
        %v2134 = vadd.f32 0.0, %v2133
        %v2135 = vpop.f32.mrb[0].mxu0
        %2136 = vmatprep.mubr.f32.mxu0 0.0
        %2137 = vmatmul.mubr.f32.gmra.mrb[0].mxu0 %v2065
        %v2138 = vpop.f32.mrb[0].mxu0
        %v2139 = vadd.f32 0.0, %v2138
        %v2140 = vpop.f32.mrb[0].mxu0
        %2141 = vdwg.mxu0
        %v2143 = vsel %vm1462, %v1897, 0
        %v2146 = vsel %vm1462, %v1898, 0
        %2148 = vmatprep.subr.mxu0 0.0
        %2149 = vmatpush1.msra.mxu0 %v1393
        %2150 = vmatprep.subr.mxu0 0.0
        %2151 = vmatpush1.msra.mxu0 %v1461
        %2152 = vmatprep.subr.mxu0 0.0
        %2153 = vmatpush1.msra.mxu0 0.0
        %2154 = vmatprep.subr.mxu0 0.0
        %2155 = vmatpush1.msra.mxu0 0.0
        %2156 = vmatprep.subr.mxu0 0.0
        %2157 = vmatpush1.msra.mxu0 0.0
        %2158 = vmatprep.subr.mxu0 0.0
        %2159 = vmatpush1.msra.mxu0 0.0
        %2160 = vmatprep.subr.mxu0 0.0
        %2161 = vmatpush1.msra.mxu0 0.0
        %2162 = vmatprep.subr.mxu0 0.0
        %2163 = vmatpush1.msra.mxu0 0.0
        %2164 = vmatprep.subr.mxu0 0.0
        %2165 = vmatpush1.msra.mxu0 0.0
        %2166 = vmatprep.subr.mxu0 0.0
        %2167 = vmatpush1.msra.mxu0 0.0
        %2168 = vmatprep.subr.mxu0 0.0
        %2169 = vmatpush1.msra.mxu0 0.0
        %2170 = vmatprep.subr.mxu0 0.0
        %2171 = vmatpush1.msra.mxu0 0.0
        %2172 = vmatprep.subr.mxu0 0.0
        %2173 = vmatpush1.msra.mxu0 0.0
        %2174 = vmatprep.subr.mxu0 0.0
        %2175 = vmatpush1.msra.mxu0 0.0
        %2176 = vmatprep.subr.mxu0 0.0
        %2177 = vmatpush1.msra.mxu0 0.0
        %2178 = vmatprep.subr.mxu0 0.0
        %2179 = vmatpush1.msra.mxu0 0.0
        %2180 = vmatprep.subr.mxu0 0.0
        %2181 = vmatpush1.msra.mxu0 0.0
        %2182 = vmatprep.subr.mxu0 0.0
        %2183 = vmatpush1.msra.mxu0 0.0
        %2184 = vmatprep.subr.mxu0 0.0
        %2185 = vmatpush1.msra.mxu0 0.0
        %2186 = vmatprep.subr.mxu0 0.0
        %2187 = vmatpush1.msra.mxu0 0.0
        %2188 = vmatprep.subr.mxu0 0.0
        %2189 = vmatpush1.msra.mxu0 0.0
        %2190 = vmatprep.subr.mxu0 0.0
        %2191 = vmatpush1.msra.mxu0 0.0
        %2192 = vmatprep.subr.mxu0 0.0
        %2193 = vmatpush1.msra.mxu0 0.0
        %2194 = vmatprep.subr.mxu0 0.0
        %2195 = vmatpush1.msra.mxu0 0.0
        %2196 = vmatprep.subr.mxu0 0.0
        %2197 = vmatpush1.msra.mxu0 0.0
        %2198 = vmatprep.subr.mxu0 0.0
        %2199 = vmatpush1.msra.mxu0 0.0
        %2200 = vmatprep.subr.mxu0 0.0
        %2201 = vmatpush1.msra.mxu0 0.0
        %2202 = vmatprep.subr.mxu0 0.0
        %2203 = vmatpush1.msra.mxu0 0.0
        %2204 = vmatprep.subr.mxu0 0.0
        %2205 = vmatpush1.msra.mxu0 0.0
        %2206 = vmatprep.subr.mxu0 0.0
        %2207 = vmatpush1.msra.mxu0 0.0
        %2208 = vmatprep.subr.mxu0 0.0
        %2209 = vmatpush1.msra.mxu0 0.0
        %2210 = vmatprep.subr.mxu0 0.0
        %2211 = vmatpush1.msra.mxu0 0.0
        %2212 = vmatprep.mubr.f32.mxu0 0.0
        %2213 = vmatmul.mubr.f32.gmra.mrb[0].mxu0 %v2143
        %v2214 = vpop.f32.mrb[0].mxu0
        %v2215 = vadd.f32 0.0, %v2214
        %v2216 = vpop.f32.mrb[0].mxu0
        %2217 = vmatprep.mubr.f32.mxu0 0.0
        %2218 = vmatmul.mubr.f32.gmra.mrb[0].mxu0 %v2146
        %v2219 = vpop.f32.mrb[0].mxu0
        %v2220 = vadd.f32 0.0, %v2219
        %v2221 = vpop.f32.mrb[0].mxu0
        %2222 = vdwg.mxu0
        %v2223 = vcombine.low %v1972, %v2134
        %v2224 = vcombine.high %v1972, %v2134
        %v2226 = vunpack.c.l.s4 1983009808
        %v2227 = vunpack.c.0.s8 %v2226
        %v2228 = vlaneseq
        %v2229 = vshrl.u32 %v2228, 7
        %v2230 = vsub.s32 %v2227, %v2229
        %v2231 = vrot.slane %v2223, %v2230
        %v2233 = vunpack.c.l.s4 1983009808
        %v2234 = vunpack.c.0.s8 %v2233
        %v2235 = vlaneseq
        %v2236 = vshrl.u32 %v2235, 7
        %v2237 = vsub.s32 %v2234, %v2236
        %v2238 = vrot.slane %v2224, %v2237
        %v2239 = vcombine.low %v2053, %v2215
        %v2240 = vcombine.high %v2053, %v2215
        %v2242 = vunpack.c.l.s4 1983009808
        %v2243 = vunpack.c.0.s8 %v2242
        %v2244 = vlaneseq
        %v2245 = vshrl.u32 %v2244, 7
        %v2246 = vsub.s32 %v2243, %v2245
        %v2247 = vrot.slane %v2239, %v2246
        %v2249 = vunpack.c.l.s4 1983009808
        %v2250 = vunpack.c.0.s8 %v2249
        %v2251 = vlaneseq
        %v2252 = vshrl.u32 %v2251, 7
        %v2253 = vsub.s32 %v2250, %v2252
        %v2254 = vrot.slane %v2240, %v2253
        %v2255 = vcombine.low %v2231, %v2247
        %v2256 = vcombine.high %v2231, %v2247
        %v2258 = vunpack.c.l.s4 1934713408
        %v2259 = vunpack.c.0.s8 %v2258
        %v2260 = vlaneseq
        %v2261 = vshrl.u32 %v2260, 7
        %v2262 = vsub.s32 %v2259, %v2261
        %v2263 = vrot.slane %v2255, %v2262
        %v2265 = vunpack.c.l.s4 1934713408
        %v2266 = vunpack.c.0.s8 %v2265
        %v2267 = vlaneseq
        %v2268 = vshrl.u32 %v2267, 7
        %v2269 = vsub.s32 %v2266, %v2268
        %v2270 = vrot.slane %v2256, %v2269
        %v2271 = vcombine.low %v2238, %v2254
        %v2272 = vcombine.high %v2238, %v2254
        %v2274 = vunpack.c.l.s4 1934713408
        %v2275 = vunpack.c.0.s8 %v2274
        %v2276 = vlaneseq
        %v2277 = vshrl.u32 %v2276, 7
        %v2278 = vsub.s32 %v2275, %v2277
        %v2279 = vrot.slane %v2271, %v2278
        %v2281 = vunpack.c.l.s4 1934713408
        %v2282 = vunpack.c.0.s8 %v2281
        %v2283 = vlaneseq
        %v2284 = vshrl.u32 %v2283, 7
        %v2285 = vsub.s32 %v2282, %v2284
        %v2286 = vrot.slane %v2272, %v2285
        %v2287 = vcombine.high %v2263, 0.0
        %v2288 = vcombine.high %v2270, 0.0
        %v2289 = vcombine.high %v2279, 0.0
        %v2290 = vcombine.high %v2286, 0.0
        %v2291 = vcombine.low %v1977, %v2139
        %v2292 = vcombine.high %v1977, %v2139
        %v2294 = vunpack.c.l.s4 1983009808
        %v2295 = vunpack.c.0.s8 %v2294
        %v2296 = vlaneseq
        %v2297 = vshrl.u32 %v2296, 7
        %v2298 = vsub.s32 %v2295, %v2297
        %v2299 = vrot.slane %v2291, %v2298
        %v2301 = vunpack.c.l.s4 1983009808
        %v2302 = vunpack.c.0.s8 %v2301
        %v2303 = vlaneseq
        %v2304 = vshrl.u32 %v2303, 7
        %v2305 = vsub.s32 %v2302, %v2304
        %v2306 = vrot.slane %v2292, %v2305
        %v2307 = vcombine.low %v2058, %v2220
        %v2308 = vcombine.high %v2058, %v2220
        %v2310 = vunpack.c.l.s4 1983009808
        %v2311 = vunpack.c.0.s8 %v2310
        %v2312 = vlaneseq
        %v2313 = vshrl.u32 %v2312, 7
        %v2314 = vsub.s32 %v2311, %v2313
        %v2315 = vrot.slane %v2307, %v2314
        %v2317 = vunpack.c.l.s4 1983009808
        %v2318 = vunpack.c.0.s8 %v2317
        %v2319 = vlaneseq
        %v2320 = vshrl.u32 %v2319, 7
        %v2321 = vsub.s32 %v2318, %v2320
        %v2322 = vrot.slane %v2308, %v2321
        %v2323 = vcombine.low %v2299, %v2315
        %v2324 = vcombine.high %v2299, %v2315
        %v2326 = vunpack.c.l.s4 1934713408
        %v2327 = vunpack.c.0.s8 %v2326
        %v2328 = vlaneseq
        %v2329 = vshrl.u32 %v2328, 7
        %v2330 = vsub.s32 %v2327, %v2329
        %v2331 = vrot.slane %v2323, %v2330
        %v2333 = vunpack.c.l.s4 1934713408
        %v2334 = vunpack.c.0.s8 %v2333
        %v2335 = vlaneseq
        %v2336 = vshrl.u32 %v2335, 7
        %v2337 = vsub.s32 %v2334, %v2336
        %v2338 = vrot.slane %v2324, %v2337
        %v2339 = vcombine.low %v2306, %v2322
        %v2340 = vcombine.high %v2306, %v2322
        %v2342 = vunpack.c.l.s4 1934713408
        %v2343 = vunpack.c.0.s8 %v2342
        %v2344 = vlaneseq
        %v2345 = vshrl.u32 %v2344, 7
        %v2346 = vsub.s32 %v2343, %v2345
        %v2347 = vrot.slane %v2339, %v2346
        %v2349 = vunpack.c.l.s4 1934713408
        %v2350 = vunpack.c.0.s8 %v2349
        %v2351 = vlaneseq
        %v2352 = vshrl.u32 %v2351, 7
        %v2353 = vsub.s32 %v2350, %v2352
        %v2354 = vrot.slane %v2340, %v2353
        %v2355 = vcombine.high %v2331, 0.0
        %v2356 = vcombine.high %v2338, 0.0
        %v2357 = vcombine.high %v2347, 0.0
        %v2358 = vcombine.high %v2354, 0.0
        %v2359 = vcombine.low %v2263, %v2270
        %v2361 = vunpack.c.l.s4 1983009808
        %v2362 = vunpack.c.0.s8 %v2361
        %v2363 = vlaneseq
        %v2364 = vshrl.u32 %v2363, 7
        %v2365 = vsub.s32 %v2362, %v2364
        %v2366 = vrot.slane %v2359, %v2365
        %v2367 = vcombine.low %v2287, %v2288
        %v2369 = vunpack.c.l.s4 1983009808
        %v2370 = vunpack.c.0.s8 %v2369
        %v2371 = vlaneseq
        %v2372 = vshrl.u32 %v2371, 7
        %v2373 = vsub.s32 %v2370, %v2372
        %v2374 = vrot.slane %v2367, %v2373
        %v2375 = vcombine.low %v2279, %v2286
        %v2377 = vunpack.c.l.s4 1983009808
        %v2378 = vunpack.c.0.s8 %v2377
        %v2379 = vlaneseq
        %v2380 = vshrl.u32 %v2379, 7
        %v2381 = vsub.s32 %v2378, %v2380
        %v2382 = vrot.slane %v2375, %v2381
        %v2383 = vcombine.low %v2289, %v2290
        %v2385 = vunpack.c.l.s4 1983009808
        %v2386 = vunpack.c.0.s8 %v2385
        %v2387 = vlaneseq
        %v2388 = vshrl.u32 %v2387, 7
        %v2389 = vsub.s32 %v2386, %v2388
        %v2390 = vrot.slane %v2383, %v2389
        %v2391 = vcombine.low %v2366, %v2374
        %v2392 = vcombine.high %v2366, %v2374
        %v2394 = vunpack.c.l.s4 1934713408
        %v2395 = vunpack.c.0.s8 %v2394
        %v2396 = vlaneseq
        %v2397 = vshrl.u32 %v2396, 7
        %v2398 = vsub.s32 %v2395, %v2397
        %v2399 = vrot.slane %v2391, %v2398
        %v2401 = vunpack.c.l.s4 1934713408
        %v2402 = vunpack.c.0.s8 %v2401
        %v2403 = vlaneseq
        %v2404 = vshrl.u32 %v2403, 7
        %v2405 = vsub.s32 %v2402, %v2404
        %v2406 = vrot.slane %v2392, %v2405
        %v2407 = vcombine.low %v2382, %v2390
        %v2408 = vcombine.high %v2382, %v2390
        %v2410 = vunpack.c.l.s4 1934713408
        %v2411 = vunpack.c.0.s8 %v2410
        %v2412 = vlaneseq
        %v2413 = vshrl.u32 %v2412, 7
        %v2414 = vsub.s32 %v2411, %v2413
        %v2415 = vrot.slane %v2407, %v2414
        %v2417 = vunpack.c.l.s4 1934713408
        %v2418 = vunpack.c.0.s8 %v2417
        %v2419 = vlaneseq
        %v2420 = vshrl.u32 %v2419, 7
        %v2421 = vsub.s32 %v2418, %v2420
        %v2422 = vrot.slane %v2408, %v2421
        %v2423 = vcombine.low %v2399, %v2415
        %v2424 = vcombine.high %v2399, %v2415
        %v2425 = vcombine.low %v2406, %v2422
        %v2426 = vcombine.high %v2406, %v2422
        %v2427 = vcombine.low %v2331, %v2338
        %v2429 = vunpack.c.l.s4 1983009808
        %v2430 = vunpack.c.0.s8 %v2429
        %v2431 = vlaneseq
        %v2432 = vshrl.u32 %v2431, 7
        %v2433 = vsub.s32 %v2430, %v2432
        %v2434 = vrot.slane %v2427, %v2433
        %v2435 = vcombine.low %v2355, %v2356
        %v2437 = vunpack.c.l.s4 1983009808
        %v2438 = vunpack.c.0.s8 %v2437
        %v2439 = vlaneseq
        %v2440 = vshrl.u32 %v2439, 7
        %v2441 = vsub.s32 %v2438, %v2440
        %v2442 = vrot.slane %v2435, %v2441
        %v2443 = vcombine.low %v2347, %v2354
        %v2445 = vunpack.c.l.s4 1983009808
        %v2446 = vunpack.c.0.s8 %v2445
        %v2447 = vlaneseq
        %v2448 = vshrl.u32 %v2447, 7
        %v2449 = vsub.s32 %v2446, %v2448
        %v2450 = vrot.slane %v2443, %v2449
        %v2451 = vcombine.low %v2357, %v2358
        %v2453 = vunpack.c.l.s4 1983009808
        %v2454 = vunpack.c.0.s8 %v2453
        %v2455 = vlaneseq
        %v2456 = vshrl.u32 %v2455, 7
        %v2457 = vsub.s32 %v2454, %v2456
        %v2458 = vrot.slane %v2451, %v2457
        %v2459 = vcombine.low %v2434, %v2442
        %v2460 = vcombine.high %v2434, %v2442
        %v2462 = vunpack.c.l.s4 1934713408
        %v2463 = vunpack.c.0.s8 %v2462
        %v2464 = vlaneseq
        %v2465 = vshrl.u32 %v2464, 7
        %v2466 = vsub.s32 %v2463, %v2465
        %v2467 = vrot.slane %v2459, %v2466
        %v2469 = vunpack.c.l.s4 1934713408
        %v2470 = vunpack.c.0.s8 %v2469
        %v2471 = vlaneseq
        %v2472 = vshrl.u32 %v2471, 7
        %v2473 = vsub.s32 %v2470, %v2472
        %v2474 = vrot.slane %v2460, %v2473
        %v2475 = vcombine.low %v2450, %v2458
        %v2476 = vcombine.high %v2450, %v2458
        %v2478 = vunpack.c.l.s4 1934713408
        %v2479 = vunpack.c.0.s8 %v2478
        %v2480 = vlaneseq
        %v2481 = vshrl.u32 %v2480, 7
        %v2482 = vsub.s32 %v2479, %v2481
        %v2483 = vrot.slane %v2475, %v2482
        %v2485 = vunpack.c.l.s4 1934713408
        %v2486 = vunpack.c.0.s8 %v2485
        %v2487 = vlaneseq
        %v2488 = vshrl.u32 %v2487, 7
        %v2489 = vsub.s32 %v2486, %v2488
        %v2490 = vrot.slane %v2476, %v2489
        %v2491 = vcombine.low %v2467, %v2483
        %v2492 = vcombine.high %v2467, %v2483
        %v2493 = vcombine.low %v2474, %v2490
        %v2494 = vcombine.high %v2474, %v2490
        %2497 = vrot.lane.b32.xlu0 %v2424, 16
        %v2498 = vpop.permute.xlu0 %2497
        %2499 = vrot.lane.b32.xlu0 %v2492, 16
        %v2500 = vpop.permute.xlu0 %2499
        %2505 = vrot.lane.b32.xlu0 %v2425, 32
        %v2506 = vpop.permute.xlu0 %2505
        %2507 = vrot.lane.b32.xlu0 %v2493, 32
        %v2508 = vpop.permute.xlu0 %2507
        %2513 = vrot.lane.b32.xlu0 %v2426, 48
        %v2514 = vpop.permute.xlu0 %2513
        %2515 = vrot.lane.b32.xlu0 %v2494, 48
        %v2516 = vpop.permute.xlu0 %2515
        %v2519 = vsel %vm1462, %v2423, %v2498
        %v2520 = vsel %vm1462, %v2491, %v2500
        %vm2521 = vcmask 261120
        %v2522 = vsel %vm2521, %v2519, %v2506
        %v2523 = vsel %vm2521, %v2520, %v2508
        %vm2524 = vcmask 392192
        %v2525 = vsel %vm2524, %v2522, %v2514
        %v2526 = vsel %vm2524, %v2523, %v2516
        %v2527 = vld [vmem:[#allocation10] sm:$0xff]
        %v2528 = vld [vmem:[#allocation10 + $0x8] sm:$0xff]
        %v2529 = vld [vmem:[#allocation10 + $0x10] sm:$0xff]
        %v2530 = vld [vmem:[#allocation10 + $0x18] sm:$0xff]
        %v2531 = vld [vmem:[#allocation10 + $0x20] sm:$0xff]
        %v2532 = vld [vmem:[#allocation10 + $0x28] sm:$0xff]
        %v2533 = vld [vmem:[#allocation10 + $0x30] sm:$0xff]
        %v2534 = vld [vmem:[#allocation10 + $0x38] sm:$0xff]
        %v2535 = vld [vmem:[%s5] sm:$0x1]
        %v2537 = vlaneseq
        %v2538 = vshrl.u32 %v2537, 7
        %v2539 = vsub.s32 0, %v2538
        %v2540 = vrot.slane %v2535, %v2539
        %v2543 = vsel %vm338, %v2525, 0
        %v2546 = vsel %vm338, %v2526, 0
        %2548 = vmatprep.subr.mxu0 0.0
        %2549 = vmatpush1.msra.mxu0 %v2527
        %2550 = vmatprep.subr.mxu0 0.0
        %2551 = vmatpush1.msra.mxu0 %v2528
        %2552 = vmatprep.subr.mxu0 0.0
        %2553 = vmatpush1.msra.mxu0 %v2529
        %2554 = vmatprep.subr.mxu0 0.0
        %2555 = vmatpush1.msra.mxu0 %v2530
        %2556 = vmatprep.subr.mxu0 0.0
        %2557 = vmatpush1.msra.mxu0 %v2531
        %2558 = vmatprep.subr.mxu0 0.0
        %2559 = vmatpush1.msra.mxu0 %v2532
        %2560 = vmatprep.subr.mxu0 0.0
        %2561 = vmatpush1.msra.mxu0 %v2533
        %2562 = vmatprep.subr.mxu0 0.0
        %2563 = vmatpush1.msra.mxu0 %v2534
        %2564 = vmatprep.subr.mxu0 0.0
        %2565 = vmatpush1.msra.mxu0 0.0
        %2566 = vmatprep.subr.mxu0 0.0
        %2567 = vmatpush1.msra.mxu0 0.0
        %2568 = vmatprep.subr.mxu0 0.0
        %2569 = vmatpush1.msra.mxu0 0.0
        %2570 = vmatprep.subr.mxu0 0.0
        %2571 = vmatpush1.msra.mxu0 0.0
        %2572 = vmatprep.subr.mxu0 0.0
        %2573 = vmatpush1.msra.mxu0 0.0
        %2574 = vmatprep.subr.mxu0 0.0
        %2575 = vmatpush1.msra.mxu0 0.0
        %2576 = vmatprep.subr.mxu0 0.0
        %2577 = vmatpush1.msra.mxu0 0.0
        %2578 = vmatprep.subr.mxu0 0.0
        %2579 = vmatpush1.msra.mxu0 0.0
        %2580 = vmatprep.subr.mxu0 0.0
        %2581 = vmatpush1.msra.mxu0 0.0
        %2582 = vmatprep.subr.mxu0 0.0
        %2583 = vmatpush1.msra.mxu0 0.0
        %2584 = vmatprep.subr.mxu0 0.0
        %2585 = vmatpush1.msra.mxu0 0.0
        %2586 = vmatprep.subr.mxu0 0.0
        %2587 = vmatpush1.msra.mxu0 0.0
        %2588 = vmatprep.subr.mxu0 0.0
        %2589 = vmatpush1.msra.mxu0 0.0
        %2590 = vmatprep.subr.mxu0 0.0
        %2591 = vmatpush1.msra.mxu0 0.0
        %2592 = vmatprep.subr.mxu0 0.0
        %2593 = vmatpush1.msra.mxu0 0.0
        %2594 = vmatprep.subr.mxu0 0.0
        %2595 = vmatpush1.msra.mxu0 0.0
        %2596 = vmatprep.subr.mxu0 0.0
        %2597 = vmatpush1.msra.mxu0 0.0
        %2598 = vmatprep.subr.mxu0 0.0
        %2599 = vmatpush1.msra.mxu0 0.0
        %2600 = vmatprep.subr.mxu0 0.0
        %2601 = vmatpush1.msra.mxu0 0.0
        %2602 = vmatprep.subr.mxu0 0.0
        %2603 = vmatpush1.msra.mxu0 0.0
        %2604 = vmatprep.subr.mxu0 0.0
        %2605 = vmatpush1.msra.mxu0 0.0
        %2606 = vmatprep.subr.mxu0 0.0
        %2607 = vmatpush1.msra.mxu0 0.0
        %2608 = vmatprep.subr.mxu0 0.0
        %2609 = vmatpush1.msra.mxu0 0.0
        %2610 = vmatprep.subr.mxu0 0.0
        %2611 = vmatpush1.msra.mxu0 0.0
        %2612 = vmatprep.mubr.f32.mxu0 0.0
        %2613 = vmatmul.mubr.f32.gmra.mrb[0].mxu0 %v2543
        %v2614 = vpop.f32.mrb[0].mxu0
        %v2615 = vadd.f32 %v2540, %v2614
        %v2616 = vpop.f32.mrb[0].mxu0
        %2617 = vmatprep.mubr.f32.mxu0 0.0
        %2618 = vmatmul.mubr.f32.gmra.mrb[0].mxu0 %v2546
        %v2619 = vpop.f32.mrb[0].mxu0
        %v2620 = vadd.f32 %v2540, %v2619
        %v2621 = vpop.f32.mrb[0].mxu0
        %2622 = vdwg.mxu0
        %2623 = vst.msk [vmem:[%s327] sm:$0xff] %vm338, %v2615
        %2624 = vst.msk [vmem:[%s327 + $0x8] sm:$0xff] %vm338, %v2620
        %s2625 = sand.u32 %s164, 1
        %s2626 = scalar_lea.sflag [#allocation4], %s2625
        %s2627 = sand.u32 %s164, 1
        %s2628 = smul.addr %s2627, 16
        %s2629 = scalar_lea.vmem [#allocation11], %s2628
        // Predicated region
        $region65: #{tpu_custom_call.1} parent=43 // pred_check
          %p2630 = pneg %p174
        $region66: #{tpu_custom_call.1} parent=43 // pred_check_branch
          %2632 = sbr.rel (%p2630) target = $region68
        $region67: #{tpu_custom_call.1} parent=43 // pred_region
          %s2634 = ssub.s32 256, 256
          %2635 = vsyncadd %s2626, %s2634
          %s2636 = smul.addr %s25, 2
          %s2637 = smul.addr %s2636, 128
          %s2638 = scalar_lea.hbm %s6, %s2637
          %s2639 = sshll.u32 %s2629, 4
          %s2640 = int_to_ptr.vmem [resolvable:$true] %s2639
          %2645 = dma.vmem_to_hbm [thread:$0]  %s2640, 256, %s2638, %s2626, 128, 128, 8
        $region68: #{tpu_custom_call.1} parent=43 // pred_fallthru
          _
      $region44: #{tpu_custom_call.1} parent=5 // pred_fallthru
        _
      %p2646 = scmp.le.s32.totalorder 2, %s20
      // Predicated region
      $region69: #{tpu_custom_call.1} parent=5 // pred_check
        %p2647 = pneg %p2646
      $region70: #{tpu_custom_call.1} parent=5 // pred_check_branch
        %2649 = sbr.rel (%p2647) target = $region72
      $region71: #{tpu_custom_call.1} parent=5 // pred_region
        %s2650 = ssub.s32 %s20, 2
        // Predicated region
        $region73: #{tpu_custom_call.1} parent=71 // pred_check
          %p2651 = pneg %p180
        $region74: #{tpu_custom_call.1} parent=71 // pred_check_branch
          %2653 = sbr.rel (%p2651) target = $region76
        $region75: #{tpu_custom_call.1} parent=71 // pred_region
          %s2654 = sand.u32 %s165, 1
          %s2655 = scalar_lea.sflag [#allocation4], %s2654
          %s2656 = sand.u32 %s165, 1
          %s2657 = smul.addr %s2656, 16
          %s2658 = scalar_lea.vmem [#allocation11], %s2657
          %2659 = dma.done %s2655, 256
        $region76: #{tpu_custom_call.1} parent=71 // pred_fallthru
          _
      $region72: #{tpu_custom_call.1} parent=5 // pred_fallthru
        _
    $region6: #{tpu_custom_call.1} parent=1 // loop_footer
      %s24 = sadd.s32 1, %s20
    $region7: #{tpu_custom_call.1} parent=1 // loop_footer_branch
      %19 = sbr.rel target = $region3
    $region8: #{tpu_custom_call.1} parent=1 // loop_exit
      _
    %2660 = vsyncpa [#allocation3], 1
    %s2661 = scalar_lea.sflag [#allocation3], 1
    %2662 = vsyncpa %s2661, 1
    %2663 = vsyncpa [#allocation6], 1
    %2664 = vsyncpa [#allocation9], 1
    %2665 = vsyncpa [#allocation4], 1
    %s2666 = scalar_lea.sflag [#allocation4], 1
    %2667 = vsyncpa %s2666, 1

</llo_original>
